<compile_context>
chip_gen: v7x
topology: tpu7x:2x2x1
jax: 0.10.0
libtpu: 0.0.40
codegen_flags: <defaults>
</compile_context>

<pallas_src>
import functools

import jax
import jax.numpy as jnp
from jax import lax
from jax.experimental import pallas as pl
from jax.experimental.pallas import tpu as pltpu


# ---------------------------------------------------------------------------
# Kernel
# ---------------------------------------------------------------------------
def instructor_head_kernel(tok_ref, mask_ref, wt_ref, out_ref, *, s_chunk, n_chunks):
    # tok_ref:  (TB, S, H) f32 or bf16 (upcast to f32 chunk-by-chunk)
    # mask_ref: (TB, S)    f32 (cast in the wrapper)
    # wt_ref:   (H, H)     W.T (transposed once in the wrapper)
    # out_ref:  (TB, H)    f32
    tb, h = out_ref.shape
    mask = mask_ref[...]                                        # (TB, S) f32

    # --- masked sum over the sequence axis, chunked to bound f32 temporaries.
    if n_chunks == 1:
        tok = tok_ref[...].astype(jnp.float32)                  # (TB, S, H)
        summed = jnp.sum(tok * mask[:, :, None], axis=1)        # (TB, H)
    else:
        def body(c, acc):
            start = pl.multiple_of(c * s_chunk, s_chunk)        # lane/sublane aligned
            chunk = tok_ref[:, pl.ds(start, s_chunk), :].astype(jnp.float32)
            m = mask_ref[:, pl.ds(start, s_chunk)]              # (TB, CS)
            return acc + jnp.sum(chunk * m[:, :, None], axis=1)

        summed = lax.fori_loop(0, n_chunks, body,
                               jnp.zeros((tb, h), jnp.float32),
                               unroll=(n_chunks <= 8))

    # --- mean pooling (clamp_min 1e-9 like the PyTorch path; EUP reciprocal).
    counts = jnp.maximum(jnp.sum(mask, axis=1, keepdims=True), 1e-9)   # (TB, 1)
    pooled = summed * pl.reciprocal(counts)                             # (TB, H)

    # --- dense: y = pooled @ W.T; W.T is pre-transposed, canonical contraction.
    wt = wt_ref[...]
    dense = jnp.dot(pooled.astype(wt.dtype), wt,
                    preferred_element_type=jnp.float32)                 # (TB, H)

    # --- L2 normalize along features (matches F.normalize eps=1e-12 clamp).
    sq_norm = jnp.sum(dense * dense, axis=1, keepdims=True)             # (TB, 1)
    inv_norm = lax.rsqrt(jnp.maximum(sq_norm, 1e-24))
    out_ref[...] = dense * inv_norm


# ---------------------------------------------------------------------------
# Generation-aware VMEM planning
# ---------------------------------------------------------------------------
def _round_up(x, m):
    return (x + m - 1) // m * m


def _is_v7x():
    try:
        kind = jax.devices()[0].device_kind.lower()
    except Exception:
        return False
    return ("v7" in kind) or ("7x" in kind)


def _device_vmem_caps():
    """Physical per-TC VMEM and the budget we allow ourselves to use."""
    phys = None
    try:
        phys = int(pltpu.get_tpu_info().vmem_capacity_bytes)
    except Exception:
        phys = None
    v7 = _is_v7x()
    if not phys or phys <= 0:
        phys = (64 << 20) if v7 else (128 << 20)
    if v7:
        phys = min(phys, 64 << 20)                    # 64 MiB per TC on v7x
    if phys <= (64 << 20):
        cap = max(phys - (10 << 20), 24 << 20)        # ~54 MiB on v7x (headroom)
    else:
        cap = min(phys - (24 << 20), 104 << 20)       # ~104 MiB on v5e/v6e
    return phys, cap


# ---------------------------------------------------------------------------
# Wrapper
# ---------------------------------------------------------------------------
def instructor_head(token_embeddings, attention_mask, dense_weight, *,
                    weight_dtype=jnp.float32, block_b=None):
    B, S, H = token_embeddings.shape
    assert dense_weight.shape == (H, H)
    assert attention_mask.shape == (B, S)

    # Wrapper-side prep: f32 mask; one-time weight transpose (the kernel then
    # uses the canonical contraction — no in-kernel 768x768 relayout).
    mask_f32 = attention_mask.astype(jnp.float32)
    w_t = dense_weight.astype(weight_dtype).T                    # (in, out) = W.T

    tok_itemsize = jnp.dtype(token_embeddings.dtype).itemsize
    w_itemsize = jnp.dtype(weight_dtype).itemsize

    # Sequence chunking: lane-aligned 128-row chunks when S is large, else a
    # single chunk padded to the sublane quantum.
    if S > 128:
        S_pad, s_chunk = _round_up(S, 128), 128
    else:
        S_pad = _round_up(S, 8)
        s_chunk = S_pad
    n_chunks = S_pad // s_chunk

    # VMEM-aware batch tile: account for double-buffered tiles AND the
    # in-kernel f32 temporaries (chunk upcast + masked product + epilogue).
    _, vmem_cap = _device_vmem_caps()
    fixed = 2 * H * H * w_itemsize + (2 << 20)        # 2x resident W.T + slack
    per_row = (2 * S_pad * H * tok_itemsize           # double-buffered tok tile
               + 2 * S_pad * 4                        # double-buffered mask tile
               + 2 * H * 4                            # double-buffered out tile
               + 2 * s_chunk * H * 4                  # f32 chunk + masked product
               + 6 * H * 4)                           # acc / pooled / dense temps
    if block_b is None:
        avail = max(vmem_cap - fixed, per_row)
        max_b = max(int(avail // per_row), 1)
        block_b = B if max_b >= B else max((max_b // 8) * 8, 8)

    B_pad = _round_up(B, block_b)
    grid = (B_pad // block_b,)

    needed = fixed + block_b * per_row
    vmem_limit = int(min(vmem_cap, max(needed + (4 << 20), 32 << 20)))

    # Zero-pad batch / sequence if needed (padded mask rows pool to exactly 0
    # thanks to the count clamp; padded batch rows are sliced off below).
    if (B_pad != B) or (S_pad != S):
        tok_in = jnp.pad(token_embeddings,
                         ((0, B_pad - B), (0, S_pad - S), (0, 0)))
        mask_in = jnp.pad(mask_f32, ((0, B_pad - B), (0, S_pad - S)))
    else:
        tok_in, mask_in = token_embeddings, mask_f32

    # Advisory cost for XLA scheduling around this memory-bound head.
    cost = pl.CostEstimate(
        flops=2 * B_pad * S_pad * H + 2 * B_pad * H * H,
        transcendentals=2 * B_pad,
        bytes_accessed=(B_pad * S_pad * H * tok_itemsize + B_pad * S_pad * 4
                        + H * H * w_itemsize + B_pad * H * 4),
    )

    # v7x: shard the batch grid across both TensorCores.
    if _is_v7x() and grid[0] >= 2:
        dim_sem = (pltpu.CORE_PARALLEL,)
    else:
        dim_sem = ("parallel",)

    vmem = pltpu.MemorySpace.VMEM
    kernel = functools.partial(instructor_head_kernel,
                               s_chunk=s_chunk, n_chunks=n_chunks)
    out = pl.pallas_call(
        kernel,
        out_shape=jax.ShapeDtypeStruct((B_pad, H), jnp.float32),
        grid=grid,
        in_specs=[
            pl.BlockSpec((block_b, S_pad, H), lambda i: (i, 0, 0), memory_space=vmem),
            pl.BlockSpec((block_b, S_pad), lambda i: (i, 0), memory_space=vmem),
            pl.BlockSpec((H, H), lambda i: (0, 0), memory_space=vmem),
        ],
        out_specs=pl.BlockSpec((block_b, H), lambda i: (i, 0), memory_space=vmem),
        compiler_params=pltpu.CompilerParams(
            dimension_semantics=dim_sem,
            vmem_limit_bytes=vmem_limit,
        ),
        cost_estimate=cost,
    )(tok_in, mask_in, w_t)

    return out[:B] if B_pad != B else out


# ---------------------------------------------------------------------------
# Pure-JAX reference (mirrors the PyTorch forward semantics exactly)
# ---------------------------------------------------------------------------
def reference(token_embeddings, attention_mask, dense_weight):
    mask = attention_mask.astype(jnp.float32)[:, :, None]
    pooled = jnp.sum(token_embeddings * mask, axis=1) / jnp.sum(mask, axis=1)
    dense = pooled @ dense_weight.T
    norm = jnp.maximum(jnp.linalg.norm(dense, axis=1, keepdims=True), 1e-12)
    return dense / norm


if __name__ == "__main__":
    H = 768  # fixed by the Dense(768, 768) layer

    key = jax.random.PRNGKey(0)
    k_tok, k_w, k_tok2, k_len2 = jax.random.split(key, 4)

    # ---- Test 1: small f32 path (B=2, S=8), exact vs reference -------------
    B, S = 2, 8
    token_embeddings = jax.random.normal(k_tok, (B, S, H), dtype=jnp.float32)
    lengths = jnp.array([8, 5], dtype=jnp.int32)
    attention_mask = (jnp.arange(S, dtype=jnp.int32)[None, :]
                      < lengths[:, None]).astype(jnp.int32)
    dense_weight = 0.02 * jax.random.normal(k_w, (H, H), dtype=jnp.float32)

    ref = reference(token_embeddings, attention_mask, dense_weight)
    out = jax.block_until_ready(
        instructor_head(token_embeddings, attention_mask, dense_weight))
    assert out.shape == (B, H)
    assert jnp.allclose(out, ref, atol=1e-5, rtol=1e-5)

    # ---- Test 2: bf16 token embeddings + bf16 weight (half HBM, bf16 MXU) --
    out_bf16 = jax.block_until_ready(
        instructor_head(token_embeddings.astype(jnp.bfloat16), attention_mask,
                        dense_weight, weight_dtype=jnp.bfloat16))
    assert float(jnp.max(jnp.abs(out_bf16 - ref))) < 5e-2

    # ---- Test 3: chunked S-reduction + batch/sequence padding path ---------
    B3, S3 = 10, 200          # S padded to 256 (2x128 chunks), B padded to 16
    tok3 = jax.random.normal(k_tok2, (B3, S3, H), dtype=jnp.float32)
    len3 = 1 + (jax.random.randint(k_len2, (B3,), 0, S3)).astype(jnp.int32)
    mask3 = (jnp.arange(S3, dtype=jnp.int32)[None, :]
             < len3[:, None]).astype(jnp.int32)
    ref3 = reference(tok3, mask3, dense_weight)
    out3 = jax.block_until_ready(
        instructor_head(tok3, mask3, dense_weight, block_b=8))
    assert out3.shape == (B3, H)
    assert jnp.allclose(out3, ref3, atol=1e-4, rtol=1e-4)

    print("KERNEL_OK")
</pallas_src>

<mosaic_0001>
module attributes {stable_mosaic.version = 11 : i64} {
  func.func @instructor_head_kernel(%arg0: i32, %arg1: memref<2x8x768xf32, #tpu.memory_space<vmem>>, %arg2: memref<2x8xf32, #tpu.memory_space<vmem>>, %arg3: memref<768x768xf32, #tpu.memory_space<vmem>>, %arg4: memref<2x768xf32, #tpu.memory_space<vmem>>) attributes {dimension_semantics = [#tpu.dimension_semantics<parallel>], iteration_bounds = array<i64: 1>, scalar_prefetch = 0 : i64, scratch_operands = 0 : i64, tpu.core_type = #tpu.core_type<tc>, window_params = [{transform_indices = @transform_0, window_bounds = array<i64: 2, 8, 768>}, {transform_indices = @transform_1, window_bounds = array<i64: 2, 8>}, {pipeline_mode = #tpu.pipeline_mode<synchronous>, transform_indices = @transform_2, window_bounds = array<i64: 768, 768>}, {transform_indices = @transform_3, window_bounds = array<i64: 2, 768>}]} {
    %c0 = arith.constant 0 : index
    %c0_0 = arith.constant 0 : index
    %0 = vector.load %arg2[%c0, %c0_0] : memref<2x8xf32, #tpu.memory_space<vmem>>, vector<2x8xf32>
    %c0_1 = arith.constant 0 : index
    %c0_2 = arith.constant 0 : index
    %c0_3 = arith.constant 0 : index
    %1 = vector.load %arg1[%c0_1, %c0_2, %c0_3] : memref<2x8x768xf32, #tpu.memory_space<vmem>>, vector<2x8x768xf32>
    %2 = vector.shape_cast %0 : vector<2x8xf32> to vector<2x8x1xf32>
    %3 = vector.broadcast %2 : vector<2x8x1xf32> to vector<2x8x768xf32>
    %4 = arith.mulf %1, %3 : vector<2x8x768xf32>
    %cst = arith.constant dense<0.000000e+00> : vector<2x768xf32>
    %5 = vector.multi_reduction <add>, %4, %cst [1] : vector<2x8x768xf32> to vector<2x768xf32>
    %cst_4 = arith.constant dense<0.000000e+00> : vector<2xf32>
    %6 = vector.multi_reduction <add>, %0, %cst_4 [1] : vector<2x8xf32> to vector<2xf32>
    %7 = vector.shape_cast %6 : vector<2xf32> to vector<2x1xf32>
    %cst_5 = arith.constant 9.99999971E-10 : f32
    %8 = vector.broadcast %cst_5 : f32 to vector<2x1xf32>
    %9 = arith.maximumf %7, %8 : vector<2x1xf32>
    %10 = tpu.reciprocal %9 : vector<2x1xf32> -> vector<2x1xf32>
    %11 = vector.broadcast %10 : vector<2x1xf32> to vector<2x768xf32>
    %12 = arith.mulf %5, %11 : vector<2x768xf32>
    %c0_6 = arith.constant 0 : index
    %c0_7 = arith.constant 0 : index
    %13 = vector.load %arg3[%c0_6, %c0_7] : memref<768x768xf32, #tpu.memory_space<vmem>>, vector<768x768xf32>
    %cst_8 = arith.constant dense<0.000000e+00> : vector<2x768xf32>
    %14 = tpu.matmul %12, %13, %cst_8 {dimension_numbers = #tpu.dot_dimension_numbers<[1], [0], [0], [1], [0, 0, 1, 1], [], []>} : vector<2x768xf32>, vector<768x768xf32>, vector<2x768xf32> -> vector<2x768xf32>
    %15 = arith.mulf %14, %14 : vector<2x768xf32>
    %cst_9 = arith.constant dense<0.000000e+00> : vector<2xf32>
    %16 = vector.multi_reduction <add>, %15, %cst_9 [1] : vector<2x768xf32> to vector<2xf32>
    %17 = vector.shape_cast %16 : vector<2xf32> to vector<2x1xf32>
    %cst_10 = arith.constant 1.000000e-24 : f32
    %18 = vector.broadcast %cst_10 : f32 to vector<2x1xf32>
    %19 = arith.maximumf %17, %18 : vector<2x1xf32>
    %20 = math.rsqrt %19 : vector<2x1xf32>
    %21 = vector.broadcast %20 : vector<2x1xf32> to vector<2x768xf32>
    %22 = arith.mulf %14, %21 : vector<2x768xf32>
    %c0_11 = arith.constant 0 : index
    %c0_12 = arith.constant 0 : index
    %23 = vector.load %arg4[%c0_11, %c0_12] : memref<2x768xf32, #tpu.memory_space<vmem>>, vector<2x768xf32>
    tpu.vector_store %arg4[%c0_11, %c0_12], %22 {strides = array<i32>} : memref<2x768xf32, #tpu.memory_space<vmem>>, vector<2x768xf32>,
    return
  }
  func.func @transform_0(%arg0: i32) -> (i32, i32, i32) {
    %c0_i32 = arith.constant 0 : i32
    %c0_i32_0 = arith.constant 0 : i32
    %c0_i32_1 = arith.constant 0 : i32
    return %arg0, %c0_i32, %c0_i32_0 : i32, i32, i32
  }
  func.func @transform_1(%arg0: i32) -> (i32, i32) {
    %c0_i32 = arith.constant 0 : i32
    %c0_i32_0 = arith.constant 0 : i32
    return %arg0, %c0_i32 : i32, i32
  }
  func.func @transform_2(%arg0: i32) -> (i32, i32) {
    %c0_i32 = arith.constant 0 : i32
    %c0_i32_0 = arith.constant 0 : i32
    %c0_i32_1 = arith.constant 0 : i32
    return %c0_i32, %c0_i32_0 : i32, i32
  }
  func.func @transform_3(%arg0: i32) -> (i32, i32) {
    %c0_i32 = arith.constant 0 : i32
    %c0_i32_0 = arith.constant 0 : i32
    return %arg0, %c0_i32 : i32, i32
  }
}

</mosaic_0001>

<llo_original>
// kernel: tpu_custom_call.1
$region0: #{tpu_custom_call.1}
  #allocation0 [shape = 'u32[]', space=smem, size = 0x4, offset = 0x4, fixed_abs, tag = 'smem constant byte address 0x4 - core index']
  #allocation1 [shape = 'u32[144,128]{1,0:T(1,128)}', space=vmem, size = 0x12000, scoped, tag = 'internal scratch']
  %s0 = inlined_call_operand.hbm [shape: f32[2,8,768], index: 0, kind: input, shape index: {}]
  %s1 = inlined_call_operand.hbm [shape: f32[2,8], index: 1, kind: input, shape index: {}]
  %s2 = inlined_call_operand.hbm [shape: f32[768,768], index: 2, kind: input, shape index: {}]
  %s3 = inlined_call_operand.hbm [shape: f32[2,768], index: 3, kind: output, shape index: {}]
  %s4 = sld [smem:[#allocation0]]
  $region34: #{tpu_custom_call.1} parent=0
    _
  %s6 = ssub.s32 1, %s4
  %s7 = scalar_select 0, %s6, %s4
  $region1: #{tpu_custom_call.1} parent=0
    #allocation2 [shape = 'u8[49152]{0}', space=vmem, size = 0xc000, scoped, tag = 'input window, operand 0, single buffered']
    #allocation3 [shape = 's32[1]{0}', space=sflag, size = 0x4, scoped, tag = 'scoped memory for tpu_custom_call.1']
    #allocation4 [shape = 's32[1]{0}', space=sflag, size = 0x4, scoped, tag = 'scoped memory for tpu_custom_call.1']
    #allocation5 [shape = 'u8[1024]{0}', space=vmem, size = 0x400, scoped, tag = 'input window, operand 1, single buffered']
    #allocation6 [shape = 's32[1]{0}', space=sflag, size = 0x4, scoped, tag = 'scoped memory for tpu_custom_call.1']
    #allocation7 [shape = 'u8[2359296]{0}', space=vmem, size = 0x240000, scoped, tag = 'input window, operand 2, single buffered']
    #allocation8 [shape = 'u8[6144]{0}', space=vmem, size = 0x1800, scoped, tag = 'output window, operand 0, single buffered']
    %8 = vsyncpa [#allocation3], 0
    %9 = vsyncpa [#allocation6], 0
    %10 = vsyncpa [#allocation4], 0
    // Predicated region
    $region2: #{tpu_custom_call.1} parent=1 // pred_check
      _
    $region3: #{tpu_custom_call.1} parent=1 // pred_check_branch
      %12 = sbr.rel (0) target = $region5
    $region4: #{tpu_custom_call.1} parent=1 // pred_region
      %s14 = ssub.s32 1536, 1536
      %15 = vsyncadd [#allocation3], %s14
      %s16 = sshll.u32 [#allocation2], 4
      %s17 = int_to_ptr.vmem [resolvable:$true] %s16
      %22 = dma.hbm_to_vmem [thread:$0]  %s0, 1536, %s17, [#allocation3], 768, 768, 48
    $region5: #{tpu_custom_call.1} parent=1 // pred_fallthru
      _
    // Predicated region
    $region6: #{tpu_custom_call.1} parent=1 // pred_check
      _
    $region7: #{tpu_custom_call.1} parent=1 // pred_check_branch
      %24 = sbr.rel (0) target = $region9
    $region8: #{tpu_custom_call.1} parent=1 // pred_region
      %s26 = ssub.s32 32, 32
      %27 = vsyncadd [#allocation6], %s26
      %s29 = sshll.u32 [#allocation5], 4
      %s30 = int_to_ptr.vmem [resolvable:$true] %s29
      %32 = dma.hbm_to_vmem [thread:$0]  %s1, 32, %s30, [#allocation6]
    $region9: #{tpu_custom_call.1} parent=1 // pred_fallthru
      _
    // Predicated region
    $region10: #{tpu_custom_call.1} parent=1 // pred_check
      _
    $region11: #{tpu_custom_call.1} parent=1 // pred_check_branch
      %34 = sbr.rel (0) target = $region13
    $region12: #{tpu_custom_call.1} parent=1 // pred_region
      %s36 = ssub.s32 73728, 73728
      %37 = vsyncadd [#allocation6], %s36
      %s38 = sshll.u32 [#allocation7], 4
      %s39 = int_to_ptr.vmem [resolvable:$true] %s38
      %44 = dma.hbm_to_vmem [thread:$0]  %s2, 73728, %s39, [#allocation6], 768, 768, 48
    $region13: #{tpu_custom_call.1} parent=1 // pred_fallthru
      _
    // Predicated region
    $region14: #{tpu_custom_call.1} parent=1 // pred_check
      _
    $region15: #{tpu_custom_call.1} parent=1 // pred_check_branch
      %46 = sbr.rel (0) target = $region17
    $region16: #{tpu_custom_call.1} parent=1 // pred_region
      %47 = dma.done [#allocation3], 1536
    $region17: #{tpu_custom_call.1} parent=1 // pred_fallthru
      _
    // Predicated region
    $region18: #{tpu_custom_call.1} parent=1 // pred_check
      _
    $region19: #{tpu_custom_call.1} parent=1 // pred_check_branch
      %49 = sbr.rel (0) target = $region21
    $region20: #{tpu_custom_call.1} parent=1 // pred_region
      %50 = dma.done [#allocation6], 32
    $region21: #{tpu_custom_call.1} parent=1 // pred_fallthru
      _
    // Predicated region
    $region22: #{tpu_custom_call.1} parent=1 // pred_check
      _
    $region23: #{tpu_custom_call.1} parent=1 // pred_check_branch
      %52 = sbr.rel (0) target = $region25
    $region24: #{tpu_custom_call.1} parent=1 // pred_region
      %53 = dma.done [#allocation6], 73728
    $region25: #{tpu_custom_call.1} parent=1 // pred_fallthru
      _
    %v54 = vld [vmem:[#allocation5] sm:$0x3]
    %v55 = vld [vmem:[#allocation2] sm:$0xff]
    %v56 = vld [vmem:[#allocation2 + $0x8] sm:$0xff]
    %v57 = vld [vmem:[#allocation2 + $0x10] sm:$0xff]
    %v58 = vld [vmem:[#allocation2 + $0x18] sm:$0xff]
    %v59 = vld [vmem:[#allocation2 + $0x20] sm:$0xff]
    %v60 = vld [vmem:[#allocation2 + $0x28] sm:$0xff]
    %v61 = vld [vmem:[#allocation2 + $0x30] sm:$0xff]
    %v62 = vld [vmem:[#allocation2 + $0x38] sm:$0xff]
    %v63 = vld [vmem:[#allocation2 + $0x40] sm:$0xff]
    %v64 = vld [vmem:[#allocation2 + $0x48] sm:$0xff]
    %v65 = vld [vmem:[#allocation2 + $0x50] sm:$0xff]
    %v66 = vld [vmem:[#allocation2 + $0x58] sm:$0xff]
    %v67 = vlaneseq
    %v68 = vshrl.u32 %v67, 7
    %v69 = vsub.s32 0, %v68
    %v70 = vrot.slane %v54, %v69
    %72 = vbcast.lane.b32.xlu0 %v70, 256
    %v73 = vpop.permute.xlu0 %72
    %v74 = vlaneseq
    %v75 = vshrl.u32 %v74, 7
    %v76 = vsub.s32 1, %v75
    %v77 = vrot.slane %v54, %v76
    %79 = vbcast.lane.b32.xlu0 %v77, 256
    %v80 = vpop.permute.xlu0 %79
    %v81 = vmul.f32 %v55, %v73
    %v82 = vmul.f32 %v56, %v73
    %v83 = vmul.f32 %v57, %v73
    %v84 = vmul.f32 %v58, %v73
    %v85 = vmul.f32 %v59, %v73
    %v86 = vmul.f32 %v60, %v73
    %v87 = vmul.f32 %v61, %v80
    %v88 = vmul.f32 %v62, %v80
    %v89 = vmul.f32 %v63, %v80
    %v90 = vmul.f32 %v64, %v80
    %v91 = vmul.f32 %v65, %v80
    %v92 = vmul.f32 %v66, %v80
    %v93 = vrot.slane %v81, 4
    %v94 = vadd.f32 %v81, %v93
    %v95 = vrot.slane %v94, 2
    %v96 = vadd.f32 %v94, %v95
    %v97 = vrot.slane %v96, 1
    %v98 = vadd.f32 %v96, %v97
    %v99 = vrot.slane %v82, 4
    %v100 = vadd.f32 %v82, %v99
    %v101 = vrot.slane %v100, 2
    %v102 = vadd.f32 %v100, %v101
    %v103 = vrot.slane %v102, 1
    %v104 = vadd.f32 %v102, %v103
    %v105 = vrot.slane %v83, 4
    %v106 = vadd.f32 %v83, %v105
    %v107 = vrot.slane %v106, 2
    %v108 = vadd.f32 %v106, %v107
    %v109 = vrot.slane %v108, 1
    %v110 = vadd.f32 %v108, %v109
    %v111 = vrot.slane %v84, 4
    %v112 = vadd.f32 %v84, %v111
    %v113 = vrot.slane %v112, 2
    %v114 = vadd.f32 %v112, %v113
    %v115 = vrot.slane %v114, 1
    %v116 = vadd.f32 %v114, %v115
    %v117 = vrot.slane %v85, 4
    %v118 = vadd.f32 %v85, %v117
    %v119 = vrot.slane %v118, 2
    %v120 = vadd.f32 %v118, %v119
    %v121 = vrot.slane %v120, 1
    %v122 = vadd.f32 %v120, %v121
    %v123 = vrot.slane %v86, 4
    %v124 = vadd.f32 %v86, %v123
    %v125 = vrot.slane %v124, 2
    %v126 = vadd.f32 %v124, %v125
    %v127 = vrot.slane %v126, 1
    %v128 = vadd.f32 %v126, %v127
    %v129 = vrot.slane %v87, 4
    %v130 = vadd.f32 %v87, %v129
    %v131 = vrot.slane %v130, 2
    %v132 = vadd.f32 %v130, %v131
    %v133 = vrot.slane %v132, 1
    %v134 = vadd.f32 %v132, %v133
    %v135 = vrot.slane %v88, 4
    %v136 = vadd.f32 %v88, %v135
    %v137 = vrot.slane %v136, 2
    %v138 = vadd.f32 %v136, %v137
    %v139 = vrot.slane %v138, 1
    %v140 = vadd.f32 %v138, %v139
    %v141 = vrot.slane %v89, 4
    %v142 = vadd.f32 %v89, %v141
    %v143 = vrot.slane %v142, 2
    %v144 = vadd.f32 %v142, %v143
    %v145 = vrot.slane %v144, 1
    %v146 = vadd.f32 %v144, %v145
    %v147 = vrot.slane %v90, 4
    %v148 = vadd.f32 %v90, %v147
    %v149 = vrot.slane %v148, 2
    %v150 = vadd.f32 %v148, %v149
    %v151 = vrot.slane %v150, 1
    %v152 = vadd.f32 %v150, %v151
    %v153 = vrot.slane %v91, 4
    %v154 = vadd.f32 %v91, %v153
    %v155 = vrot.slane %v154, 2
    %v156 = vadd.f32 %v154, %v155
    %v157 = vrot.slane %v156, 1
    %v158 = vadd.f32 %v156, %v157
    %v159 = vrot.slane %v92, 4
    %v160 = vadd.f32 %v92, %v159
    %v161 = vrot.slane %v160, 2
    %v162 = vadd.f32 %v160, %v161
    %v163 = vrot.slane %v162, 1
    %v164 = vadd.f32 %v162, %v163
    %vm165 = vcmask 58368
    %v166 = vsel %vm165, %v54, 0.0
    %167 = vadd.xlane.f32.xlu0 %v166
    %v168 = vpop.xlane.xlu0 %167
    %v169 = vmax.f32 %v168, 1e-09
    %v170 = vrcp.pop %v169
    %v172 = vrot.slane %v170, 1
    %v175 = vmul.f32 %v98, %v170
    %v176 = vmul.f32 %v104, %v170
    %v177 = vmul.f32 %v110, %v170
    %v178 = vmul.f32 %v116, %v170
    %v179 = vmul.f32 %v122, %v170
    %v180 = vmul.f32 %v128, %v170
    %v181 = vmul.f32 %v134, %v172
    %v182 = vmul.f32 %v140, %v172
    %v183 = vmul.f32 %v146, %v172
    %v184 = vmul.f32 %v152, %v172
    %v185 = vmul.f32 %v158, %v172
    %v186 = vmul.f32 %v164, %v172
    %v187 = vld [vmem:[#allocation7] sm:$0xff]
    %v188 = vld [vmem:[#allocation7 + $0x8] sm:$0xff]
    %v189 = vld [vmem:[#allocation7 + $0x10] sm:$0xff]
    %v190 = vld [vmem:[#allocation7 + $0x18] sm:$0xff]
    %v191 = vld [vmem:[#allocation7 + $0x20] sm:$0xff]
    %v192 = vld [vmem:[#allocation7 + $0x28] sm:$0xff]
    %v193 = vld [vmem:[#allocation7 + $0x30] sm:$0xff]
    %v194 = vld [vmem:[#allocation7 + $0x38] sm:$0xff]
    %v195 = vld [vmem:[#allocation7 + $0x40] sm:$0xff]
    %v196 = vld [vmem:[#allocation7 + $0x48] sm:$0xff]
    %v197 = vld [vmem:[#allocation7 + $0x50] sm:$0xff]
    %v198 = vld [vmem:[#allocation7 + $0x58] sm:$0xff]
    %v199 = vld [vmem:[#allocation7 + $0x60] sm:$0xff]
    %v200 = vld [vmem:[#allocation7 + $0x68] sm:$0xff]
    %v201 = vld [vmem:[#allocation7 + $0x70] sm:$0xff]
    %v202 = vld [vmem:[#allocation7 + $0x78] sm:$0xff]
    %v203 = vld [vmem:[#allocation7 + $0x80] sm:$0xff]
    %v204 = vld [vmem:[#allocation7 + $0x88] sm:$0xff]
    %v205 = vld [vmem:[#allocation7 + $0x90] sm:$0xff]
    %v206 = vld [vmem:[#allocation7 + $0x98] sm:$0xff]
    %v207 = vld [vmem:[#allocation7 + $0xa0] sm:$0xff]
    %v208 = vld [vmem:[#allocation7 + $0xa8] sm:$0xff]
    %v209 = vld [vmem:[#allocation7 + $0xb0] sm:$0xff]
    %v210 = vld [vmem:[#allocation7 + $0xb8] sm:$0xff]
    %v211 = vld [vmem:[#allocation7 + $0xc0] sm:$0xff]
    %v212 = vld [vmem:[#allocation7 + $0xc8] sm:$0xff]
    %v213 = vld [vmem:[#allocation7 + $0xd0] sm:$0xff]
    %v214 = vld [vmem:[#allocation7 + $0xd8] sm:$0xff]
    %v215 = vld [vmem:[#allocation7 + $0xe0] sm:$0xff]
    %v216 = vld [vmem:[#allocation7 + $0xe8] sm:$0xff]
    %v217 = vld [vmem:[#allocation7 + $0xf0] sm:$0xff]
    %v218 = vld [vmem:[#allocation7 + $0xf8] sm:$0xff]
    %v219 = vld [vmem:[#allocation7 + $0x100] sm:$0xff]
    %v220 = vld [vmem:[#allocation7 + $0x108] sm:$0xff]
    %v221 = vld [vmem:[#allocation7 + $0x110] sm:$0xff]
    %v222 = vld [vmem:[#allocation7 + $0x118] sm:$0xff]
    %v223 = vld [vmem:[#allocation7 + $0x120] sm:$0xff]
    %v224 = vld [vmem:[#allocation7 + $0x128] sm:$0xff]
    %v225 = vld [vmem:[#allocation7 + $0x130] sm:$0xff]
    %v226 = vld [vmem:[#allocation7 + $0x138] sm:$0xff]
    %v227 = vld [vmem:[#allocation7 + $0x140] sm:$0xff]
    %v228 = vld [vmem:[#allocation7 + $0x148] sm:$0xff]
    %v229 = vld [vmem:[#allocation7 + $0x150] sm:$0xff]
    %v230 = vld [vmem:[#allocation7 + $0x158] sm:$0xff]
    %v231 = vld [vmem:[#allocation7 + $0x160] sm:$0xff]
    %v232 = vld [vmem:[#allocation7 + $0x168] sm:$0xff]
    %v233 = vld [vmem:[#allocation7 + $0x170] sm:$0xff]
    %v234 = vld [vmem:[#allocation7 + $0x178] sm:$0xff]
    %v235 = vld [vmem:[#allocation7 + $0x180] sm:$0xff]
    %v236 = vld [vmem:[#allocation7 + $0x188] sm:$0xff]
    %v237 = vld [vmem:[#allocation7 + $0x190] sm:$0xff]
    %v238 = vld [vmem:[#allocation7 + $0x198] sm:$0xff]
    %v239 = vld [vmem:[#allocation7 + $0x1a0] sm:$0xff]
    %v240 = vld [vmem:[#allocation7 + $0x1a8] sm:$0xff]
    %v241 = vld [vmem:[#allocation7 + $0x1b0] sm:$0xff]
    %v242 = vld [vmem:[#allocation7 + $0x1b8] sm:$0xff]
    %v243 = vld [vmem:[#allocation7 + $0x1c0] sm:$0xff]
    %v244 = vld [vmem:[#allocation7 + $0x1c8] sm:$0xff]
    %v245 = vld [vmem:[#allocation7 + $0x1d0] sm:$0xff]
    %v246 = vld [vmem:[#allocation7 + $0x1d8] sm:$0xff]
    %v247 = vld [vmem:[#allocation7 + $0x1e0] sm:$0xff]
    %v248 = vld [vmem:[#allocation7 + $0x1e8] sm:$0xff]
    %v249 = vld [vmem:[#allocation7 + $0x1f0] sm:$0xff]
    %v250 = vld [vmem:[#allocation7 + $0x1f8] sm:$0xff]
    %v251 = vld [vmem:[#allocation7 + $0x200] sm:$0xff]
    %v252 = vld [vmem:[#allocation7 + $0x208] sm:$0xff]
    %v253 = vld [vmem:[#allocation7 + $0x210] sm:$0xff]
    %v254 = vld [vmem:[#allocation7 + $0x218] sm:$0xff]
    %v255 = vld [vmem:[#allocation7 + $0x220] sm:$0xff]
    %v256 = vld [vmem:[#allocation7 + $0x228] sm:$0xff]
    %v257 = vld [vmem:[#allocation7 + $0x230] sm:$0xff]
    %v258 = vld [vmem:[#allocation7 + $0x238] sm:$0xff]
    %v259 = vld [vmem:[#allocation7 + $0x240] sm:$0xff]
    %v260 = vld [vmem:[#allocation7 + $0x248] sm:$0xff]
    %v261 = vld [vmem:[#allocation7 + $0x250] sm:$0xff]
    %v262 = vld [vmem:[#allocation7 + $0x258] sm:$0xff]
    %v263 = vld [vmem:[#allocation7 + $0x260] sm:$0xff]
    %v264 = vld [vmem:[#allocation7 + $0x268] sm:$0xff]
    %v265 = vld [vmem:[#allocation7 + $0x270] sm:$0xff]
    %v266 = vld [vmem:[#allocation7 + $0x278] sm:$0xff]
    %v267 = vld [vmem:[#allocation7 + $0x280] sm:$0xff]
    %v268 = vld [vmem:[#allocation7 + $0x288] sm:$0xff]
    %v269 = vld [vmem:[#allocation7 + $0x290] sm:$0xff]
    %v270 = vld [vmem:[#allocation7 + $0x298] sm:$0xff]
    %v271 = vld [vmem:[#allocation7 + $0x2a0] sm:$0xff]
    %v272 = vld [vmem:[#allocation7 + $0x2a8] sm:$0xff]
    %v273 = vld [vmem:[#allocation7 + $0x2b0] sm:$0xff]
    %v274 = vld [vmem:[#allocation7 + $0x2b8] sm:$0xff]
    %v275 = vld [vmem:[#allocation7 + $0x2c0] sm:$0xff]
    %v276 = vld [vmem:[#allocation7 + $0x2c8] sm:$0xff]
    %v277 = vld [vmem:[#allocation7 + $0x2d0] sm:$0xff]
    %v278 = vld [vmem:[#allocation7 + $0x2d8] sm:$0xff]
    %v279 = vld [vmem:[#allocation7 + $0x2e0] sm:$0xff]
    %v280 = vld [vmem:[#allocation7 + $0x2e8] sm:$0xff]
    %v281 = vld [vmem:[#allocation7 + $0x2f0] sm:$0xff]
    %v282 = vld [vmem:[#allocation7 + $0x2f8] sm:$0xff]
    %v283 = vld [vmem:[#allocation7 + $0x300] sm:$0xff]
    %v284 = vld [vmem:[#allocation7 + $0x308] sm:$0xff]
    %v285 = vld [vmem:[#allocation7 + $0x310] sm:$0xff]
    %v286 = vld [vmem:[#allocation7 + $0x318] sm:$0xff]
    %v287 = vld [vmem:[#allocation7 + $0x320] sm:$0xff]
    %v288 = vld [vmem:[#allocation7 + $0x328] sm:$0xff]
    %v289 = vld [vmem:[#allocation7 + $0x330] sm:$0xff]
    %v290 = vld [vmem:[#allocation7 + $0x338] sm:$0xff]
    %v291 = vld [vmem:[#allocation7 + $0x340] sm:$0xff]
    %v292 = vld [vmem:[#allocation7 + $0x348] sm:$0xff]
    %v293 = vld [vmem:[#allocation7 + $0x350] sm:$0xff]
    %v294 = vld [vmem:[#allocation7 + $0x358] sm:$0xff]
    %v295 = vld [vmem:[#allocation7 + $0x360] sm:$0xff]
    %v296 = vld [vmem:[#allocation7 + $0x368] sm:$0xff]
    %v297 = vld [vmem:[#allocation7 + $0x370] sm:$0xff]
    %v298 = vld [vmem:[#allocation7 + $0x378] sm:$0xff]
    %v299 = vld [vmem:[#allocation7 + $0x380] sm:$0xff]
    %v300 = vld [vmem:[#allocation7 + $0x388] sm:$0xff]
    %v301 = vld [vmem:[#allocation7 + $0x390] sm:$0xff]
    %v302 = vld [vmem:[#allocation7 + $0x398] sm:$0xff]
    %v303 = vld [vmem:[#allocation7 + $0x3a0] sm:$0xff]
    %v304 = vld [vmem:[#allocation7 + $0x3a8] sm:$0xff]
    %v305 = vld [vmem:[#allocation7 + $0x3b0] sm:$0xff]
    %v306 = vld [vmem:[#allocation7 + $0x3b8] sm:$0xff]
    %v307 = vld [vmem:[#allocation7 + $0x3c0] sm:$0xff]
    %v308 = vld [vmem:[#allocation7 + $0x3c8] sm:$0xff]
    %v309 = vld [vmem:[#allocation7 + $0x3d0] sm:$0xff]
    %v310 = vld [vmem:[#allocation7 + $0x3d8] sm:$0xff]
    %v311 = vld [vmem:[#allocation7 + $0x3e0] sm:$0xff]
    %v312 = vld [vmem:[#allocation7 + $0x3e8] sm:$0xff]
    %v313 = vld [vmem:[#allocation7 + $0x3f0] sm:$0xff]
    %v314 = vld [vmem:[#allocation7 + $0x3f8] sm:$0xff]
    %v315 = vld [vmem:[#allocation7 + $0x400] sm:$0xff]
    %v316 = vld [vmem:[#allocation7 + $0x408] sm:$0xff]
    %v317 = vld [vmem:[#allocation7 + $0x410] sm:$0xff]
    %v318 = vld [vmem:[#allocation7 + $0x418] sm:$0xff]
    %v319 = vld [vmem:[#allocation7 + $0x420] sm:$0xff]
    %v320 = vld [vmem:[#allocation7 + $0x428] sm:$0xff]
    %v321 = vld [vmem:[#allocation7 + $0x430] sm:$0xff]
    %v322 = vld [vmem:[#allocation7 + $0x438] sm:$0xff]
    %v323 = vld [vmem:[#allocation7 + $0x440] sm:$0xff]
    %v324 = vld [vmem:[#allocation7 + $0x448] sm:$0xff]
    %v325 = vld [vmem:[#allocation7 + $0x450] sm:$0xff]
    %v326 = vld [vmem:[#allocation7 + $0x458] sm:$0xff]
    %v327 = vld [vmem:[#allocation7 + $0x460] sm:$0xff]
    %v328 = vld [vmem:[#allocation7 + $0x468] sm:$0xff]
    %v329 = vld [vmem:[#allocation7 + $0x470] sm:$0xff]
    %v330 = vld [vmem:[#allocation7 + $0x478] sm:$0xff]
    %v331 = vld [vmem:[#allocation7 + $0x480] sm:$0xff]
    %v332 = vld [vmem:[#allocation7 + $0x488] sm:$0xff]
    %v333 = vld [vmem:[#allocation7 + $0x490] sm:$0xff]
    %v334 = vld [vmem:[#allocation7 + $0x498] sm:$0xff]
    %v335 = vld [vmem:[#allocation7 + $0x4a0] sm:$0xff]
    %v336 = vld [vmem:[#allocation7 + $0x4a8] sm:$0xff]
    %v337 = vld [vmem:[#allocation7 + $0x4b0] sm:$0xff]
    %v338 = vld [vmem:[#allocation7 + $0x4b8] sm:$0xff]
    %v339 = vld [vmem:[#allocation7 + $0x4c0] sm:$0xff]
    %v340 = vld [vmem:[#allocation7 + $0x4c8] sm:$0xff]
    %v341 = vld [vmem:[#allocation7 + $0x4d0] sm:$0xff]
    %v342 = vld [vmem:[#allocation7 + $0x4d8] sm:$0xff]
    %v343 = vld [vmem:[#allocation7 + $0x4e0] sm:$0xff]
    %v344 = vld [vmem:[#allocation7 + $0x4e8] sm:$0xff]
    %v345 = vld [vmem:[#allocation7 + $0x4f0] sm:$0xff]
    %v346 = vld [vmem:[#allocation7 + $0x4f8] sm:$0xff]
    %v347 = vld [vmem:[#allocation7 + $0x500] sm:$0xff]
    %v348 = vld [vmem:[#allocation7 + $0x508] sm:$0xff]
    %v349 = vld [vmem:[#allocation7 + $0x510] sm:$0xff]
    %v350 = vld [vmem:[#allocation7 + $0x518] sm:$0xff]
    %v351 = vld [vmem:[#allocation7 + $0x520] sm:$0xff]
    %v352 = vld [vmem:[#allocation7 + $0x528] sm:$0xff]
    %v353 = vld [vmem:[#allocation7 + $0x530] sm:$0xff]
    %v354 = vld [vmem:[#allocation7 + $0x538] sm:$0xff]
    %v355 = vld [vmem:[#allocation7 + $0x540] sm:$0xff]
    %v356 = vld [vmem:[#allocation7 + $0x548] sm:$0xff]
    %v357 = vld [vmem:[#allocation7 + $0x550] sm:$0xff]
    %v358 = vld [vmem:[#allocation7 + $0x558] sm:$0xff]
    %v359 = vld [vmem:[#allocation7 + $0x560] sm:$0xff]
    %v360 = vld [vmem:[#allocation7 + $0x568] sm:$0xff]
    %v361 = vld [vmem:[#allocation7 + $0x570] sm:$0xff]
    %v362 = vld [vmem:[#allocation7 + $0x578] sm:$0xff]
    %v363 = vld [vmem:[#allocation7 + $0x580] sm:$0xff]
    %v364 = vld [vmem:[#allocation7 + $0x588] sm:$0xff]
    %v365 = vld [vmem:[#allocation7 + $0x590] sm:$0xff]
    %v366 = vld [vmem:[#allocation7 + $0x598] sm:$0xff]
    %v367 = vld [vmem:[#allocation7 + $0x5a0] sm:$0xff]
    %v368 = vld [vmem:[#allocation7 + $0x5a8] sm:$0xff]
    %v369 = vld [vmem:[#allocation7 + $0x5b0] sm:$0xff]
    %v370 = vld [vmem:[#allocation7 + $0x5b8] sm:$0xff]
    %v371 = vld [vmem:[#allocation7 + $0x5c0] sm:$0xff]
    %v372 = vld [vmem:[#allocation7 + $0x5c8] sm:$0xff]
    %v373 = vld [vmem:[#allocation7 + $0x5d0] sm:$0xff]
    %v374 = vld [vmem:[#allocation7 + $0x5d8] sm:$0xff]
    %v375 = vld [vmem:[#allocation7 + $0x5e0] sm:$0xff]
    %v376 = vld [vmem:[#allocation7 + $0x5e8] sm:$0xff]
    %v377 = vld [vmem:[#allocation7 + $0x5f0] sm:$0xff]
    %v378 = vld [vmem:[#allocation7 + $0x5f8] sm:$0xff]
    %v379 = vld [vmem:[#allocation7 + $0x600] sm:$0xff]
    %v380 = vld [vmem:[#allocation7 + $0x608] sm:$0xff]
    %v381 = vld [vmem:[#allocation7 + $0x610] sm:$0xff]
    %v382 = vld [vmem:[#allocation7 + $0x618] sm:$0xff]
    %v383 = vld [vmem:[#allocation7 + $0x620] sm:$0xff]
    %v384 = vld [vmem:[#allocation7 + $0x628] sm:$0xff]
    %v385 = vld [vmem:[#allocation7 + $0x630] sm:$0xff]
    %v386 = vld [vmem:[#allocation7 + $0x638] sm:$0xff]
    %v387 = vld [vmem:[#allocation7 + $0x640] sm:$0xff]
    %v388 = vld [vmem:[#allocation7 + $0x648] sm:$0xff]
    %v389 = vld [vmem:[#allocation7 + $0x650] sm:$0xff]
    %v390 = vld [vmem:[#allocation7 + $0x658] sm:$0xff]
    %v391 = vld [vmem:[#allocation7 + $0x660] sm:$0xff]
    %v392 = vld [vmem:[#allocation7 + $0x668] sm:$0xff]
    %v393 = vld [vmem:[#allocation7 + $0x670] sm:$0xff]
    %v394 = vld [vmem:[#allocation7 + $0x678] sm:$0xff]
    %v395 = vld [vmem:[#allocation7 + $0x680] sm:$0xff]
    %v396 = vld [vmem:[#allocation7 + $0x688] sm:$0xff]
    %v397 = vld [vmem:[#allocation7 + $0x690] sm:$0xff]
    %v398 = vld [vmem:[#allocation7 + $0x698] sm:$0xff]
    %v399 = vld [vmem:[#allocation7 + $0x6a0] sm:$0xff]
    %v400 = vld [vmem:[#allocation7 + $0x6a8] sm:$0xff]
    %v401 = vld [vmem:[#allocation7 + $0x6b0] sm:$0xff]
    %v402 = vld [vmem:[#allocation7 + $0x6b8] sm:$0xff]
    %v403 = vld [vmem:[#allocation7 + $0x6c0] sm:$0xff]
    %v404 = vld [vmem:[#allocation7 + $0x6c8] sm:$0xff]
    %v405 = vld [vmem:[#allocation7 + $0x6d0] sm:$0xff]
    %v406 = vld [vmem:[#allocation7 + $0x6d8] sm:$0xff]
    %v407 = vld [vmem:[#allocation7 + $0x6e0] sm:$0xff]
    %v408 = vld [vmem:[#allocation7 + $0x6e8] sm:$0xff]
    %v409 = vld [vmem:[#allocation7 + $0x6f0] sm:$0xff]
    %v410 = vld [vmem:[#allocation7 + $0x6f8] sm:$0xff]
    %v411 = vld [vmem:[#allocation7 + $0x700] sm:$0xff]
    %v412 = vld [vmem:[#allocation7 + $0x708] sm:$0xff]
    %v413 = vld [vmem:[#allocation7 + $0x710] sm:$0xff]
    %v414 = vld [vmem:[#allocation7 + $0x718] sm:$0xff]
    %v415 = vld [vmem:[#allocation7 + $0x720] sm:$0xff]
    %v416 = vld [vmem:[#allocation7 + $0x728] sm:$0xff]
    %v417 = vld [vmem:[#allocation7 + $0x730] sm:$0xff]
    %v418 = vld [vmem:[#allocation7 + $0x738] sm:$0xff]
    %v419 = vld [vmem:[#allocation7 + $0x740] sm:$0xff]
    %v420 = vld [vmem:[#allocation7 + $0x748] sm:$0xff]
    %v421 = vld [vmem:[#allocation7 + $0x750] sm:$0xff]
    %v422 = vld [vmem:[#allocation7 + $0x758] sm:$0xff]
    %v423 = vld [vmem:[#allocation7 + $0x760] sm:$0xff]
    %v424 = vld [vmem:[#allocation7 + $0x768] sm:$0xff]
    %v425 = vld [vmem:[#allocation7 + $0x770] sm:$0xff]
    %v426 = vld [vmem:[#allocation7 + $0x778] sm:$0xff]
    %v427 = vld [vmem:[#allocation7 + $0x780] sm:$0xff]
    %v428 = vld [vmem:[#allocation7 + $0x788] sm:$0xff]
    %v429 = vld [vmem:[#allocation7 + $0x790] sm:$0xff]
    %v430 = vld [vmem:[#allocation7 + $0x798] sm:$0xff]
    %v431 = vld [vmem:[#allocation7 + $0x7a0] sm:$0xff]
    %v432 = vld [vmem:[#allocation7 + $0x7a8] sm:$0xff]
    %v433 = vld [vmem:[#allocation7 + $0x7b0] sm:$0xff]
    %v434 = vld [vmem:[#allocation7 + $0x7b8] sm:$0xff]
    %v435 = vld [vmem:[#allocation7 + $0x7c0] sm:$0xff]
    %v436 = vld [vmem:[#allocation7 + $0x7c8] sm:$0xff]
    %v437 = vld [vmem:[#allocation7 + $0x7d0] sm:$0xff]
    %v438 = vld [vmem:[#allocation7 + $0x7d8] sm:$0xff]
    %v439 = vld [vmem:[#allocation7 + $0x7e0] sm:$0xff]
    %v440 = vld [vmem:[#allocation7 + $0x7e8] sm:$0xff]
    %v441 = vld [vmem:[#allocation7 + $0x7f0] sm:$0xff]
    %v442 = vld [vmem:[#allocation7 + $0x7f8] sm:$0xff]
    %v443 = vld [vmem:[#allocation7 + $0x800] sm:$0xff]
    %v444 = vld [vmem:[#allocation7 + $0x808] sm:$0xff]
    %v445 = vld [vmem:[#allocation7 + $0x810] sm:$0xff]
    %v446 = vld [vmem:[#allocation7 + $0x818] sm:$0xff]
    %v447 = vld [vmem:[#allocation7 + $0x820] sm:$0xff]
    %v448 = vld [vmem:[#allocation7 + $0x828] sm:$0xff]
    %v449 = vld [vmem:[#allocation7 + $0x830] sm:$0xff]
    %v450 = vld [vmem:[#allocation7 + $0x838] sm:$0xff]
    %v451 = vld [vmem:[#allocation7 + $0x840] sm:$0xff]
    %v452 = vld [vmem:[#allocation7 + $0x848] sm:$0xff]
    %v453 = vld [vmem:[#allocation7 + $0x850] sm:$0xff]
    %v454 = vld [vmem:[#allocation7 + $0x858] sm:$0xff]
    %v455 = vld [vmem:[#allocation7 + $0x860] sm:$0xff]
    %v456 = vld [vmem:[#allocation7 + $0x868] sm:$0xff]
    %v457 = vld [vmem:[#allocation7 + $0x870] sm:$0xff]
    %v458 = vld [vmem:[#allocation7 + $0x878] sm:$0xff]
    %v459 = vld [vmem:[#allocation7 + $0x880] sm:$0xff]
    %v460 = vld [vmem:[#allocation7 + $0x888] sm:$0xff]
    %v461 = vld [vmem:[#allocation7 + $0x890] sm:$0xff]
    %v462 = vld [vmem:[#allocation7 + $0x898] sm:$0xff]
    %v463 = vld [vmem:[#allocation7 + $0x8a0] sm:$0xff]
    %v464 = vld [vmem:[#allocation7 + $0x8a8] sm:$0xff]
    %v465 = vld [vmem:[#allocation7 + $0x8b0] sm:$0xff]
    %v466 = vld [vmem:[#allocation7 + $0x8b8] sm:$0xff]
    %v467 = vld [vmem:[#allocation7 + $0x8c0] sm:$0xff]
    %v468 = vld [vmem:[#allocation7 + $0x8c8] sm:$0xff]
    %v469 = vld [vmem:[#allocation7 + $0x8d0] sm:$0xff]
    %v470 = vld [vmem:[#allocation7 + $0x8d8] sm:$0xff]
    %v471 = vld [vmem:[#allocation7 + $0x8e0] sm:$0xff]
    %v472 = vld [vmem:[#allocation7 + $0x8e8] sm:$0xff]
    %v473 = vld [vmem:[#allocation7 + $0x8f0] sm:$0xff]
    %v474 = vld [vmem:[#allocation7 + $0x8f8] sm:$0xff]
    %v475 = vld [vmem:[#allocation7 + $0x900] sm:$0xff]
    %v476 = vld [vmem:[#allocation7 + $0x908] sm:$0xff]
    %v477 = vld [vmem:[#allocation7 + $0x910] sm:$0xff]
    %v478 = vld [vmem:[#allocation7 + $0x918] sm:$0xff]
    %v479 = vld [vmem:[#allocation7 + $0x920] sm:$0xff]
    %v480 = vld [vmem:[#allocation7 + $0x928] sm:$0xff]
    %v481 = vld [vmem:[#allocation7 + $0x930] sm:$0xff]
    %v482 = vld [vmem:[#allocation7 + $0x938] sm:$0xff]
    %v483 = vld [vmem:[#allocation7 + $0x940] sm:$0xff]
    %v484 = vld [vmem:[#allocation7 + $0x948] sm:$0xff]
    %v485 = vld [vmem:[#allocation7 + $0x950] sm:$0xff]
    %v486 = vld [vmem:[#allocation7 + $0x958] sm:$0xff]
    %v487 = vld [vmem:[#allocation7 + $0x960] sm:$0xff]
    %v488 = vld [vmem:[#allocation7 + $0x968] sm:$0xff]
    %v489 = vld [vmem:[#allocation7 + $0x970] sm:$0xff]
    %v490 = vld [vmem:[#allocation7 + $0x978] sm:$0xff]
    %v491 = vld [vmem:[#allocation7 + $0x980] sm:$0xff]
    %v492 = vld [vmem:[#allocation7 + $0x988] sm:$0xff]
    %v493 = vld [vmem:[#allocation7 + $0x990] sm:$0xff]
    %v494 = vld [vmem:[#allocation7 + $0x998] sm:$0xff]
    %v495 = vld [vmem:[#allocation7 + $0x9a0] sm:$0xff]
    %v496 = vld [vmem:[#allocation7 + $0x9a8] sm:$0xff]
    %v497 = vld [vmem:[#allocation7 + $0x9b0] sm:$0xff]
    %v498 = vld [vmem:[#allocation7 + $0x9b8] sm:$0xff]
    %v499 = vld [vmem:[#allocation7 + $0x9c0] sm:$0xff]
    %v500 = vld [vmem:[#allocation7 + $0x9c8] sm:$0xff]
    %v501 = vld [vmem:[#allocation7 + $0x9d0] sm:$0xff]
    %v502 = vld [vmem:[#allocation7 + $0x9d8] sm:$0xff]
    %v503 = vld [vmem:[#allocation7 + $0x9e0] sm:$0xff]
    %v504 = vld [vmem:[#allocation7 + $0x9e8] sm:$0xff]
    %v505 = vld [vmem:[#allocation7 + $0x9f0] sm:$0xff]
    %v506 = vld [vmem:[#allocation7 + $0x9f8] sm:$0xff]
    %v507 = vld [vmem:[#allocation7 + $0xa00] sm:$0xff]
    %v508 = vld [vmem:[#allocation7 + $0xa08] sm:$0xff]
    %v509 = vld [vmem:[#allocation7 + $0xa10] sm:$0xff]
    %v510 = vld [vmem:[#allocation7 + $0xa18] sm:$0xff]
    %v511 = vld [vmem:[#allocation7 + $0xa20] sm:$0xff]
    %v512 = vld [vmem:[#allocation7 + $0xa28] sm:$0xff]
    %v513 = vld [vmem:[#allocation7 + $0xa30] sm:$0xff]
    %v514 = vld [vmem:[#allocation7 + $0xa38] sm:$0xff]
    %v515 = vld [vmem:[#allocation7 + $0xa40] sm:$0xff]
    %v516 = vld [vmem:[#allocation7 + $0xa48] sm:$0xff]
    %v517 = vld [vmem:[#allocation7 + $0xa50] sm:$0xff]
    %v518 = vld [vmem:[#allocation7 + $0xa58] sm:$0xff]
    %v519 = vld [vmem:[#allocation7 + $0xa60] sm:$0xff]
    %v520 = vld [vmem:[#allocation7 + $0xa68] sm:$0xff]
    %v521 = vld [vmem:[#allocation7 + $0xa70] sm:$0xff]
    %v522 = vld [vmem:[#allocation7 + $0xa78] sm:$0xff]
    %v523 = vld [vmem:[#allocation7 + $0xa80] sm:$0xff]
    %v524 = vld [vmem:[#allocation7 + $0xa88] sm:$0xff]
    %v525 = vld [vmem:[#allocation7 + $0xa90] sm:$0xff]
    %v526 = vld [vmem:[#allocation7 + $0xa98] sm:$0xff]
    %v527 = vld [vmem:[#allocation7 + $0xaa0] sm:$0xff]
    %v528 = vld [vmem:[#allocation7 + $0xaa8] sm:$0xff]
    %v529 = vld [vmem:[#allocation7 + $0xab0] sm:$0xff]
    %v530 = vld [vmem:[#allocation7 + $0xab8] sm:$0xff]
    %v531 = vld [vmem:[#allocation7 + $0xac0] sm:$0xff]
    %v532 = vld [vmem:[#allocation7 + $0xac8] sm:$0xff]
    %v533 = vld [vmem:[#allocation7 + $0xad0] sm:$0xff]
    %v534 = vld [vmem:[#allocation7 + $0xad8] sm:$0xff]
    %v535 = vld [vmem:[#allocation7 + $0xae0] sm:$0xff]
    %v536 = vld [vmem:[#allocation7 + $0xae8] sm:$0xff]
    %v537 = vld [vmem:[#allocation7 + $0xaf0] sm:$0xff]
    %v538 = vld [vmem:[#allocation7 + $0xaf8] sm:$0xff]
    %v539 = vld [vmem:[#allocation7 + $0xb00] sm:$0xff]
    %v540 = vld [vmem:[#allocation7 + $0xb08] sm:$0xff]
    %v541 = vld [vmem:[#allocation7 + $0xb10] sm:$0xff]
    %v542 = vld [vmem:[#allocation7 + $0xb18] sm:$0xff]
    %v543 = vld [vmem:[#allocation7 + $0xb20] sm:$0xff]
    %v544 = vld [vmem:[#allocation7 + $0xb28] sm:$0xff]
    %v545 = vld [vmem:[#allocation7 + $0xb30] sm:$0xff]
    %v546 = vld [vmem:[#allocation7 + $0xb38] sm:$0xff]
    %v547 = vld [vmem:[#allocation7 + $0xb40] sm:$0xff]
    %v548 = vld [vmem:[#allocation7 + $0xb48] sm:$0xff]
    %v549 = vld [vmem:[#allocation7 + $0xb50] sm:$0xff]
    %v550 = vld [vmem:[#allocation7 + $0xb58] sm:$0xff]
    %v551 = vld [vmem:[#allocation7 + $0xb60] sm:$0xff]
    %v552 = vld [vmem:[#allocation7 + $0xb68] sm:$0xff]
    %v553 = vld [vmem:[#allocation7 + $0xb70] sm:$0xff]
    %v554 = vld [vmem:[#allocation7 + $0xb78] sm:$0xff]
    %v555 = vld [vmem:[#allocation7 + $0xb80] sm:$0xff]
    %v556 = vld [vmem:[#allocation7 + $0xb88] sm:$0xff]
    %v557 = vld [vmem:[#allocation7 + $0xb90] sm:$0xff]
    %v558 = vld [vmem:[#allocation7 + $0xb98] sm:$0xff]
    %v559 = vld [vmem:[#allocation7 + $0xba0] sm:$0xff]
    %v560 = vld [vmem:[#allocation7 + $0xba8] sm:$0xff]
    %v561 = vld [vmem:[#allocation7 + $0xbb0] sm:$0xff]
    %v562 = vld [vmem:[#allocation7 + $0xbb8] sm:$0xff]
    %v563 = vld [vmem:[#allocation7 + $0xbc0] sm:$0xff]
    %v564 = vld [vmem:[#allocation7 + $0xbc8] sm:$0xff]
    %v565 = vld [vmem:[#allocation7 + $0xbd0] sm:$0xff]
    %v566 = vld [vmem:[#allocation7 + $0xbd8] sm:$0xff]
    %v567 = vld [vmem:[#allocation7 + $0xbe0] sm:$0xff]
    %v568 = vld [vmem:[#allocation7 + $0xbe8] sm:$0xff]
    %v569 = vld [vmem:[#allocation7 + $0xbf0] sm:$0xff]
    %v570 = vld [vmem:[#allocation7 + $0xbf8] sm:$0xff]
    %v571 = vld [vmem:[#allocation7 + $0xc00] sm:$0xff]
    %v572 = vld [vmem:[#allocation7 + $0xc08] sm:$0xff]
    %v573 = vld [vmem:[#allocation7 + $0xc10] sm:$0xff]
    %v574 = vld [vmem:[#allocation7 + $0xc18] sm:$0xff]
    %v575 = vld [vmem:[#allocation7 + $0xc20] sm:$0xff]
    %v576 = vld [vmem:[#allocation7 + $0xc28] sm:$0xff]
    %v577 = vld [vmem:[#allocation7 + $0xc30] sm:$0xff]
    %v578 = vld [vmem:[#allocation7 + $0xc38] sm:$0xff]
    %v579 = vld [vmem:[#allocation7 + $0xc40] sm:$0xff]
    %v580 = vld [vmem:[#allocation7 + $0xc48] sm:$0xff]
    %v581 = vld [vmem:[#allocation7 + $0xc50] sm:$0xff]
    %v582 = vld [vmem:[#allocation7 + $0xc58] sm:$0xff]
    %v583 = vld [vmem:[#allocation7 + $0xc60] sm:$0xff]
    %v584 = vld [vmem:[#allocation7 + $0xc68] sm:$0xff]
    %v585 = vld [vmem:[#allocation7 + $0xc70] sm:$0xff]
    %v586 = vld [vmem:[#allocation7 + $0xc78] sm:$0xff]
    %v587 = vld [vmem:[#allocation7 + $0xc80] sm:$0xff]
    %v588 = vld [vmem:[#allocation7 + $0xc88] sm:$0xff]
    %v589 = vld [vmem:[#allocation7 + $0xc90] sm:$0xff]
    %v590 = vld [vmem:[#allocation7 + $0xc98] sm:$0xff]
    %v591 = vld [vmem:[#allocation7 + $0xca0] sm:$0xff]
    %v592 = vld [vmem:[#allocation7 + $0xca8] sm:$0xff]
    %v593 = vld [vmem:[#allocation7 + $0xcb0] sm:$0xff]
    %v594 = vld [vmem:[#allocation7 + $0xcb8] sm:$0xff]
    %v595 = vld [vmem:[#allocation7 + $0xcc0] sm:$0xff]
    %v596 = vld [vmem:[#allocation7 + $0xcc8] sm:$0xff]
    %v597 = vld [vmem:[#allocation7 + $0xcd0] sm:$0xff]
    %v598 = vld [vmem:[#allocation7 + $0xcd8] sm:$0xff]
    %v599 = vld [vmem:[#allocation7 + $0xce0] sm:$0xff]
    %v600 = vld [vmem:[#allocation7 + $0xce8] sm:$0xff]
    %v601 = vld [vmem:[#allocation7 + $0xcf0] sm:$0xff]
    %v602 = vld [vmem:[#allocation7 + $0xcf8] sm:$0xff]
    %v603 = vld [vmem:[#allocation7 + $0xd00] sm:$0xff]
    %v604 = vld [vmem:[#allocation7 + $0xd08] sm:$0xff]
    %v605 = vld [vmem:[#allocation7 + $0xd10] sm:$0xff]
    %v606 = vld [vmem:[#allocation7 + $0xd18] sm:$0xff]
    %v607 = vld [vmem:[#allocation7 + $0xd20] sm:$0xff]
    %v608 = vld [vmem:[#allocation7 + $0xd28] sm:$0xff]
    %v609 = vld [vmem:[#allocation7 + $0xd30] sm:$0xff]
    %v610 = vld [vmem:[#allocation7 + $0xd38] sm:$0xff]
    %v611 = vld [vmem:[#allocation7 + $0xd40] sm:$0xff]
    %v612 = vld [vmem:[#allocation7 + $0xd48] sm:$0xff]
    %v613 = vld [vmem:[#allocation7 + $0xd50] sm:$0xff]
    %v614 = vld [vmem:[#allocation7 + $0xd58] sm:$0xff]
    %v615 = vld [vmem:[#allocation7 + $0xd60] sm:$0xff]
    %v616 = vld [vmem:[#allocation7 + $0xd68] sm:$0xff]
    %v617 = vld [vmem:[#allocation7 + $0xd70] sm:$0xff]
    %v618 = vld [vmem:[#allocation7 + $0xd78] sm:$0xff]
    %v619 = vld [vmem:[#allocation7 + $0xd80] sm:$0xff]
    %v620 = vld [vmem:[#allocation7 + $0xd88] sm:$0xff]
    %v621 = vld [vmem:[#allocation7 + $0xd90] sm:$0xff]
    %v622 = vld [vmem:[#allocation7 + $0xd98] sm:$0xff]
    %v623 = vld [vmem:[#allocation7 + $0xda0] sm:$0xff]
    %v624 = vld [vmem:[#allocation7 + $0xda8] sm:$0xff]
    %v625 = vld [vmem:[#allocation7 + $0xdb0] sm:$0xff]
    %v626 = vld [vmem:[#allocation7 + $0xdb8] sm:$0xff]
    %v627 = vld [vmem:[#allocation7 + $0xdc0] sm:$0xff]
    %v628 = vld [vmem:[#allocation7 + $0xdc8] sm:$0xff]
    %v629 = vld [vmem:[#allocation7 + $0xdd0] sm:$0xff]
    %v630 = vld [vmem:[#allocation7 + $0xdd8] sm:$0xff]
    %v631 = vld [vmem:[#allocation7 + $0xde0] sm:$0xff]
    %v632 = vld [vmem:[#allocation7 + $0xde8] sm:$0xff]
    %v633 = vld [vmem:[#allocation7 + $0xdf0] sm:$0xff]
    %v634 = vld [vmem:[#allocation7 + $0xdf8] sm:$0xff]
    %v635 = vld [vmem:[#allocation7 + $0xe00] sm:$0xff]
    %v636 = vld [vmem:[#allocation7 + $0xe08] sm:$0xff]
    %v637 = vld [vmem:[#allocation7 + $0xe10] sm:$0xff]
    %v638 = vld [vmem:[#allocation7 + $0xe18] sm:$0xff]
    %v639 = vld [vmem:[#allocation7 + $0xe20] sm:$0xff]
    %v640 = vld [vmem:[#allocation7 + $0xe28] sm:$0xff]
    %v641 = vld [vmem:[#allocation7 + $0xe30] sm:$0xff]
    %v642 = vld [vmem:[#allocation7 + $0xe38] sm:$0xff]
    %v643 = vld [vmem:[#allocation7 + $0xe40] sm:$0xff]
    %v644 = vld [vmem:[#allocation7 + $0xe48] sm:$0xff]
    %v645 = vld [vmem:[#allocation7 + $0xe50] sm:$0xff]
    %v646 = vld [vmem:[#allocation7 + $0xe58] sm:$0xff]
    %v647 = vld [vmem:[#allocation7 + $0xe60] sm:$0xff]
    %v648 = vld [vmem:[#allocation7 + $0xe68] sm:$0xff]
    %v649 = vld [vmem:[#allocation7 + $0xe70] sm:$0xff]
    %v650 = vld [vmem:[#allocation7 + $0xe78] sm:$0xff]
    %v651 = vld [vmem:[#allocation7 + $0xe80] sm:$0xff]
    %v652 = vld [vmem:[#allocation7 + $0xe88] sm:$0xff]
    %v653 = vld [vmem:[#allocation7 + $0xe90] sm:$0xff]
    %v654 = vld [vmem:[#allocation7 + $0xe98] sm:$0xff]
    %v655 = vld [vmem:[#allocation7 + $0xea0] sm:$0xff]
    %v656 = vld [vmem:[#allocation7 + $0xea8] sm:$0xff]
    %v657 = vld [vmem:[#allocation7 + $0xeb0] sm:$0xff]
    %v658 = vld [vmem:[#allocation7 + $0xeb8] sm:$0xff]
    %v659 = vld [vmem:[#allocation7 + $0xec0] sm:$0xff]
    %v660 = vld [vmem:[#allocation7 + $0xec8] sm:$0xff]
    %v661 = vld [vmem:[#allocation7 + $0xed0] sm:$0xff]
    %v662 = vld [vmem:[#allocation7 + $0xed8] sm:$0xff]
    %v663 = vld [vmem:[#allocation7 + $0xee0] sm:$0xff]
    %v664 = vld [vmem:[#allocation7 + $0xee8] sm:$0xff]
    %v665 = vld [vmem:[#allocation7 + $0xef0] sm:$0xff]
    %v666 = vld [vmem:[#allocation7 + $0xef8] sm:$0xff]
    %v667 = vld [vmem:[#allocation7 + $0xf00] sm:$0xff]
    %v668 = vld [vmem:[#allocation7 + $0xf08] sm:$0xff]
    %v669 = vld [vmem:[#allocation7 + $0xf10] sm:$0xff]
    %v670 = vld [vmem:[#allocation7 + $0xf18] sm:$0xff]
    %v671 = vld [vmem:[#allocation7 + $0xf20] sm:$0xff]
    %v672 = vld [vmem:[#allocation7 + $0xf28] sm:$0xff]
    %v673 = vld [vmem:[#allocation7 + $0xf30] sm:$0xff]
    %v674 = vld [vmem:[#allocation7 + $0xf38] sm:$0xff]
    %v675 = vld [vmem:[#allocation7 + $0xf40] sm:$0xff]
    %v676 = vld [vmem:[#allocation7 + $0xf48] sm:$0xff]
    %v677 = vld [vmem:[#allocation7 + $0xf50] sm:$0xff]
    %v678 = vld [vmem:[#allocation7 + $0xf58] sm:$0xff]
    %v679 = vld [vmem:[#allocation7 + $0xf60] sm:$0xff]
    %v680 = vld [vmem:[#allocation7 + $0xf68] sm:$0xff]
    %v681 = vld [vmem:[#allocation7 + $0xf70] sm:$0xff]
    %v682 = vld [vmem:[#allocation7 + $0xf78] sm:$0xff]
    %v683 = vld [vmem:[#allocation7 + $0xf80] sm:$0xff]
    %v684 = vld [vmem:[#allocation7 + $0xf88] sm:$0xff]
    %v685 = vld [vmem:[#allocation7 + $0xf90] sm:$0xff]
    %v686 = vld [vmem:[#allocation7 + $0xf98] sm:$0xff]
    %v687 = vld [vmem:[#allocation7 + $0xfa0] sm:$0xff]
    %v688 = vld [vmem:[#allocation7 + $0xfa8] sm:$0xff]
    %v689 = vld [vmem:[#allocation7 + $0xfb0] sm:$0xff]
    %v690 = vld [vmem:[#allocation7 + $0xfb8] sm:$0xff]
    %v691 = vld [vmem:[#allocation7 + $0xfc0] sm:$0xff]
    %v692 = vld [vmem:[#allocation7 + $0xfc8] sm:$0xff]
    %v693 = vld [vmem:[#allocation7 + $0xfd0] sm:$0xff]
    %v694 = vld [vmem:[#allocation7 + $0xfd8] sm:$0xff]
    %v695 = vld [vmem:[#allocation7 + $0xfe0] sm:$0xff]
    %v696 = vld [vmem:[#allocation7 + $0xfe8] sm:$0xff]
    %v697 = vld [vmem:[#allocation7 + $0xff0] sm:$0xff]
    %v698 = vld [vmem:[#allocation7 + $0xff8] sm:$0xff]
    %v699 = vld [vmem:[#allocation7 + $0x1000] sm:$0xff]
    %v700 = vld [vmem:[#allocation7 + $0x1008] sm:$0xff]
    %v701 = vld [vmem:[#allocation7 + $0x1010] sm:$0xff]
    %v702 = vld [vmem:[#allocation7 + $0x1018] sm:$0xff]
    %v703 = vld [vmem:[#allocation7 + $0x1020] sm:$0xff]
    %v704 = vld [vmem:[#allocation7 + $0x1028] sm:$0xff]
    %v705 = vld [vmem:[#allocation7 + $0x1030] sm:$0xff]
    %v706 = vld [vmem:[#allocation7 + $0x1038] sm:$0xff]
    %v707 = vld [vmem:[#allocation7 + $0x1040] sm:$0xff]
    %v708 = vld [vmem:[#allocation7 + $0x1048] sm:$0xff]
    %v709 = vld [vmem:[#allocation7 + $0x1050] sm:$0xff]
    %v710 = vld [vmem:[#allocation7 + $0x1058] sm:$0xff]
    %v711 = vld [vmem:[#allocation7 + $0x1060] sm:$0xff]
    %v712 = vld [vmem:[#allocation7 + $0x1068] sm:$0xff]
    %v713 = vld [vmem:[#allocation7 + $0x1070] sm:$0xff]
    %v714 = vld [vmem:[#allocation7 + $0x1078] sm:$0xff]
    %v715 = vld [vmem:[#allocation7 + $0x1080] sm:$0xff]
    %v716 = vld [vmem:[#allocation7 + $0x1088] sm:$0xff]
    %v717 = vld [vmem:[#allocation7 + $0x1090] sm:$0xff]
    %v718 = vld [vmem:[#allocation7 + $0x1098] sm:$0xff]
    %v719 = vld [vmem:[#allocation7 + $0x10a0] sm:$0xff]
    %v720 = vld [vmem:[#allocation7 + $0x10a8] sm:$0xff]
    %v721 = vld [vmem:[#allocation7 + $0x10b0] sm:$0xff]
    %v722 = vld [vmem:[#allocation7 + $0x10b8] sm:$0xff]
    %v723 = vld [vmem:[#allocation7 + $0x10c0] sm:$0xff]
    %v724 = vld [vmem:[#allocation7 + $0x10c8] sm:$0xff]
    %v725 = vld [vmem:[#allocation7 + $0x10d0] sm:$0xff]
    %v726 = vld [vmem:[#allocation7 + $0x10d8] sm:$0xff]
    %v727 = vld [vmem:[#allocation7 + $0x10e0] sm:$0xff]
    %v728 = vld [vmem:[#allocation7 + $0x10e8] sm:$0xff]
    %v729 = vld [vmem:[#allocation7 + $0x10f0] sm:$0xff]
    %v730 = vld [vmem:[#allocation7 + $0x10f8] sm:$0xff]
    %v731 = vld [vmem:[#allocation7 + $0x1100] sm:$0xff]
    %v732 = vld [vmem:[#allocation7 + $0x1108] sm:$0xff]
    %v733 = vld [vmem:[#allocation7 + $0x1110] sm:$0xff]
    %v734 = vld [vmem:[#allocation7 + $0x1118] sm:$0xff]
    %v735 = vld [vmem:[#allocation7 + $0x1120] sm:$0xff]
    %v736 = vld [vmem:[#allocation7 + $0x1128] sm:$0xff]
    %v737 = vld [vmem:[#allocation7 + $0x1130] sm:$0xff]
    %v738 = vld [vmem:[#allocation7 + $0x1138] sm:$0xff]
    %v739 = vld [vmem:[#allocation7 + $0x1140] sm:$0xff]
    %v740 = vld [vmem:[#allocation7 + $0x1148] sm:$0xff]
    %v741 = vld [vmem:[#allocation7 + $0x1150] sm:$0xff]
    %v742 = vld [vmem:[#allocation7 + $0x1158] sm:$0xff]
    %v743 = vld [vmem:[#allocation7 + $0x1160] sm:$0xff]
    %v744 = vld [vmem:[#allocation7 + $0x1168] sm:$0xff]
    %v745 = vld [vmem:[#allocation7 + $0x1170] sm:$0xff]
    %v746 = vld [vmem:[#allocation7 + $0x1178] sm:$0xff]
    %v747 = vld [vmem:[#allocation7 + $0x1180] sm:$0xff]
    %v748 = vld [vmem:[#allocation7 + $0x1188] sm:$0xff]
    %v749 = vld [vmem:[#allocation7 + $0x1190] sm:$0xff]
    %v750 = vld [vmem:[#allocation7 + $0x1198] sm:$0xff]
    %v751 = vld [vmem:[#allocation7 + $0x11a0] sm:$0xff]
    %v752 = vld [vmem:[#allocation7 + $0x11a8] sm:$0xff]
    %v753 = vld [vmem:[#allocation7 + $0x11b0] sm:$0xff]
    %v754 = vld [vmem:[#allocation7 + $0x11b8] sm:$0xff]
    %v755 = vld [vmem:[#allocation7 + $0x11c0] sm:$0xff]
    %v756 = vld [vmem:[#allocation7 + $0x11c8] sm:$0xff]
    %v757 = vld [vmem:[#allocation7 + $0x11d0] sm:$0xff]
    %v758 = vld [vmem:[#allocation7 + $0x11d8] sm:$0xff]
    %v759 = vld [vmem:[#allocation7 + $0x11e0] sm:$0xff]
    %v760 = vld [vmem:[#allocation7 + $0x11e8] sm:$0xff]
    %v761 = vld [vmem:[#allocation7 + $0x11f0] sm:$0xff]
    %v762 = vld [vmem:[#allocation7 + $0x11f8] sm:$0xff]
    %v775 = vrot.slane %v181, 7
    %vm776 = vcmask 1041409
    %v777 = vsel %vm776, %v775, %v175
    %v778 = vrot.slane %v182, 7
    %v779 = vsel %vm776, %v778, %v176
    %v780 = vrot.slane %v183, 7
    %v781 = vsel %vm776, %v780, %v177
    %v782 = vrot.slane %v184, 7
    %v783 = vsel %vm776, %v782, %v178
    %v784 = vrot.slane %v185, 7
    %v785 = vsel %vm776, %v784, %v179
    %v786 = vrot.slane %v186, 7
    %v787 = vsel %vm776, %v786, %v180
    %794 = vmatprep.subr.mxu0 %v188
    %795 = vmatpush1.msra.mxu0 %v187
    %796 = vmatprep.subr.mxu0 %v194
    %797 = vmatpush1.msra.mxu0 %v193
    %798 = vmatprep.subr.mxu0 %v200
    %799 = vmatpush1.msra.mxu0 %v199
    %800 = vmatprep.subr.mxu0 %v206
    %801 = vmatpush1.msra.mxu0 %v205
    %802 = vmatprep.subr.mxu0 %v212
    %803 = vmatpush1.msra.mxu0 %v211
    %804 = vmatprep.subr.mxu0 %v218
    %805 = vmatpush1.msra.mxu0 %v217
    %806 = vmatprep.subr.mxu0 %v224
    %807 = vmatpush1.msra.mxu0 %v223
    %808 = vmatprep.subr.mxu0 %v230
    %809 = vmatpush1.msra.mxu0 %v229
    %810 = vmatprep.subr.mxu0 %v236
    %811 = vmatpush1.msra.mxu0 %v235
    %812 = vmatprep.subr.mxu0 %v242
    %813 = vmatpush1.msra.mxu0 %v241
    %814 = vmatprep.subr.mxu0 %v248
    %815 = vmatpush1.msra.mxu0 %v247
    %816 = vmatprep.subr.mxu0 %v254
    %817 = vmatpush1.msra.mxu0 %v253
    %818 = vmatprep.subr.mxu0 %v260
    %819 = vmatpush1.msra.mxu0 %v259
    %820 = vmatprep.subr.mxu0 %v266
    %821 = vmatpush1.msra.mxu0 %v265
    %822 = vmatprep.subr.mxu0 %v272
    %823 = vmatpush1.msra.mxu0 %v271
    %824 = vmatprep.subr.mxu0 %v278
    %825 = vmatpush1.msra.mxu0 %v277
    %826 = vmatprep.subr.mxu0 %v284
    %827 = vmatpush1.msra.mxu0 %v283
    %828 = vmatprep.subr.mxu0 %v290
    %829 = vmatpush1.msra.mxu0 %v289
    %830 = vmatprep.subr.mxu0 %v296
    %831 = vmatpush1.msra.mxu0 %v295
    %832 = vmatprep.subr.mxu0 %v302
    %833 = vmatpush1.msra.mxu0 %v301
    %834 = vmatprep.subr.mxu0 %v308
    %835 = vmatpush1.msra.mxu0 %v307
    %836 = vmatprep.subr.mxu0 %v314
    %837 = vmatpush1.msra.mxu0 %v313
    %838 = vmatprep.subr.mxu0 %v320
    %839 = vmatpush1.msra.mxu0 %v319
    %840 = vmatprep.subr.mxu0 %v326
    %841 = vmatpush1.msra.mxu0 %v325
    %842 = vmatprep.subr.mxu0 %v332
    %843 = vmatpush1.msra.mxu0 %v331
    %844 = vmatprep.subr.mxu0 %v338
    %845 = vmatpush1.msra.mxu0 %v337
    %846 = vmatprep.subr.mxu0 %v344
    %847 = vmatpush1.msra.mxu0 %v343
    %848 = vmatprep.subr.mxu0 %v350
    %849 = vmatpush1.msra.mxu0 %v349
    %850 = vmatprep.subr.mxu0 %v356
    %851 = vmatpush1.msra.mxu0 %v355
    %852 = vmatprep.subr.mxu0 %v362
    %853 = vmatpush1.msra.mxu0 %v361
    %854 = vmatprep.subr.mxu0 %v368
    %855 = vmatpush1.msra.mxu0 %v367
    %856 = vmatprep.subr.mxu0 %v374
    %857 = vmatpush1.msra.mxu0 %v373
    %858 = vmatprep.mubr.f32.mxu0 %v779
    %859 = vmatmul.mubr.f32.gmra.mrb[0].mxu0 %v777
    %v860 = vpop.f32.mrb[0].mxu0
    %v861 = vadd.f32 0.0, %v860
    %v862 = vpop.f32.mrb[0].mxu0
    %v863 = vadd.f32 0.0, %v862
    %864 = vdwg.mxu0
    %865 = vmatprep.subr.mxu0 %v380
    %866 = vmatpush1.msra.mxu0 %v379
    %867 = vmatprep.subr.mxu0 %v386
    %868 = vmatpush1.msra.mxu0 %v385
    %869 = vmatprep.subr.mxu0 %v392
    %870 = vmatpush1.msra.mxu0 %v391
    %871 = vmatprep.subr.mxu0 %v398
    %872 = vmatpush1.msra.mxu0 %v397
    %873 = vmatprep.subr.mxu0 %v404
    %874 = vmatpush1.msra.mxu0 %v403
    %875 = vmatprep.subr.mxu0 %v410
    %876 = vmatpush1.msra.mxu0 %v409
    %877 = vmatprep.subr.mxu0 %v416
    %878 = vmatpush1.msra.mxu0 %v415
    %879 = vmatprep.subr.mxu0 %v422
    %880 = vmatpush1.msra.mxu0 %v421
    %881 = vmatprep.subr.mxu0 %v428
    %882 = vmatpush1.msra.mxu0 %v427
    %883 = vmatprep.subr.mxu0 %v434
    %884 = vmatpush1.msra.mxu0 %v433
    %885 = vmatprep.subr.mxu0 %v440
    %886 = vmatpush1.msra.mxu0 %v439
    %887 = vmatprep.subr.mxu0 %v446
    %888 = vmatpush1.msra.mxu0 %v445
    %889 = vmatprep.subr.mxu0 %v452
    %890 = vmatpush1.msra.mxu0 %v451
    %891 = vmatprep.subr.mxu0 %v458
    %892 = vmatpush1.msra.mxu0 %v457
    %893 = vmatprep.subr.mxu0 %v464
    %894 = vmatpush1.msra.mxu0 %v463
    %895 = vmatprep.subr.mxu0 %v470
    %896 = vmatpush1.msra.mxu0 %v469
    %897 = vmatprep.subr.mxu0 %v476
    %898 = vmatpush1.msra.mxu0 %v475
    %899 = vmatprep.subr.mxu0 %v482
    %900 = vmatpush1.msra.mxu0 %v481
    %901 = vmatprep.subr.mxu0 %v488
    %902 = vmatpush1.msra.mxu0 %v487
    %903 = vmatprep.subr.mxu0 %v494
    %904 = vmatpush1.msra.mxu0 %v493
    %905 = vmatprep.subr.mxu0 %v500
    %906 = vmatpush1.msra.mxu0 %v499
    %907 = vmatprep.subr.mxu0 %v506
    %908 = vmatpush1.msra.mxu0 %v505
    %909 = vmatprep.subr.mxu0 %v512
    %910 = vmatpush1.msra.mxu0 %v511
    %911 = vmatprep.subr.mxu0 %v518
    %912 = vmatpush1.msra.mxu0 %v517
    %913 = vmatprep.subr.mxu0 %v524
    %914 = vmatpush1.msra.mxu0 %v523
    %915 = vmatprep.subr.mxu0 %v530
    %916 = vmatpush1.msra.mxu0 %v529
    %917 = vmatprep.subr.mxu0 %v536
    %918 = vmatpush1.msra.mxu0 %v535
    %919 = vmatprep.subr.mxu0 %v542
    %920 = vmatpush1.msra.mxu0 %v541
    %921 = vmatprep.subr.mxu0 %v548
    %922 = vmatpush1.msra.mxu0 %v547
    %923 = vmatprep.subr.mxu0 %v554
    %924 = vmatpush1.msra.mxu0 %v553
    %925 = vmatprep.subr.mxu0 %v560
    %926 = vmatpush1.msra.mxu0 %v559
    %927 = vmatprep.subr.mxu0 %v566
    %928 = vmatpush1.msra.mxu0 %v565
    %929 = vmatprep.mubr.f32.mxu0 %v783
    %930 = vmatmul.mubr.f32.gmra.mrb[0].mxu0 %v781
    %v931 = vpop.f32.mrb[0].mxu0
    %v932 = vadd.f32 %v861, %v931
    %v933 = vpop.f32.mrb[0].mxu0
    %v934 = vadd.f32 %v863, %v933
    %935 = vdwg.mxu0
    %936 = vmatprep.subr.mxu0 %v572
    %937 = vmatpush1.msra.mxu0 %v571
    %938 = vmatprep.subr.mxu0 %v578
    %939 = vmatpush1.msra.mxu0 %v577
    %940 = vmatprep.subr.mxu0 %v584
    %941 = vmatpush1.msra.mxu0 %v583
    %942 = vmatprep.subr.mxu0 %v590
    %943 = vmatpush1.msra.mxu0 %v589
    %944 = vmatprep.subr.mxu0 %v596
    %945 = vmatpush1.msra.mxu0 %v595
    %946 = vmatprep.subr.mxu0 %v602
    %947 = vmatpush1.msra.mxu0 %v601
    %948 = vmatprep.subr.mxu0 %v608
    %949 = vmatpush1.msra.mxu0 %v607
    %950 = vmatprep.subr.mxu0 %v614
    %951 = vmatpush1.msra.mxu0 %v613
    %952 = vmatprep.subr.mxu0 %v620
    %953 = vmatpush1.msra.mxu0 %v619
    %954 = vmatprep.subr.mxu0 %v626
    %955 = vmatpush1.msra.mxu0 %v625
    %956 = vmatprep.subr.mxu0 %v632
    %957 = vmatpush1.msra.mxu0 %v631
    %958 = vmatprep.subr.mxu0 %v638
    %959 = vmatpush1.msra.mxu0 %v637
    %960 = vmatprep.subr.mxu0 %v644
    %961 = vmatpush1.msra.mxu0 %v643
    %962 = vmatprep.subr.mxu0 %v650
    %963 = vmatpush1.msra.mxu0 %v649
    %964 = vmatprep.subr.mxu0 %v656
    %965 = vmatpush1.msra.mxu0 %v655
    %966 = vmatprep.subr.mxu0 %v662
    %967 = vmatpush1.msra.mxu0 %v661
    %968 = vmatprep.subr.mxu0 %v668
    %969 = vmatpush1.msra.mxu0 %v667
    %970 = vmatprep.subr.mxu0 %v674
    %971 = vmatpush1.msra.mxu0 %v673
    %972 = vmatprep.subr.mxu0 %v680
    %973 = vmatpush1.msra.mxu0 %v679
    %974 = vmatprep.subr.mxu0 %v686
    %975 = vmatpush1.msra.mxu0 %v685
    %976 = vmatprep.subr.mxu0 %v692
    %977 = vmatpush1.msra.mxu0 %v691
    %978 = vmatprep.subr.mxu0 %v698
    %979 = vmatpush1.msra.mxu0 %v697
    %980 = vmatprep.subr.mxu0 %v704
    %981 = vmatpush1.msra.mxu0 %v703
    %982 = vmatprep.subr.mxu0 %v710
    %983 = vmatpush1.msra.mxu0 %v709
    %984 = vmatprep.subr.mxu0 %v716
    %985 = vmatpush1.msra.mxu0 %v715
    %986 = vmatprep.subr.mxu0 %v722
    %987 = vmatpush1.msra.mxu0 %v721
    %988 = vmatprep.subr.mxu0 %v728
    %989 = vmatpush1.msra.mxu0 %v727
    %990 = vmatprep.subr.mxu0 %v734
    %991 = vmatpush1.msra.mxu0 %v733
    %992 = vmatprep.subr.mxu0 %v740
    %993 = vmatpush1.msra.mxu0 %v739
    %994 = vmatprep.subr.mxu0 %v746
    %995 = vmatpush1.msra.mxu0 %v745
    %996 = vmatprep.subr.mxu0 %v752
    %997 = vmatpush1.msra.mxu0 %v751
    %998 = vmatprep.subr.mxu0 %v758
    %999 = vmatpush1.msra.mxu0 %v757
    %1000 = vmatprep.mubr.f32.mxu0 %v787
    %1001 = vmatmul.mubr.f32.gmra.mrb[0].mxu0 %v785
    %v1002 = vpop.f32.mrb[0].mxu0
    %v1003 = vadd.f32 %v932, %v1002
    %v1004 = vpop.f32.mrb[0].mxu0
    %v1005 = vadd.f32 %v934, %v1004
    %1006 = vdwg.mxu0
    %1007 = vmatprep.subr.mxu0 %v190
    %1008 = vmatpush1.msra.mxu0 %v189
    %1009 = vmatprep.subr.mxu0 %v196
    %1010 = vmatpush1.msra.mxu0 %v195
    %1011 = vmatprep.subr.mxu0 %v202
    %1012 = vmatpush1.msra.mxu0 %v201
    %1013 = vmatprep.subr.mxu0 %v208
    %1014 = vmatpush1.msra.mxu0 %v207
    %1015 = vmatprep.subr.mxu0 %v214
    %1016 = vmatpush1.msra.mxu0 %v213
    %1017 = vmatprep.subr.mxu0 %v220
    %1018 = vmatpush1.msra.mxu0 %v219
    %1019 = vmatprep.subr.mxu0 %v226
    %1020 = vmatpush1.msra.mxu0 %v225
    %1021 = vmatprep.subr.mxu0 %v232
    %1022 = vmatpush1.msra.mxu0 %v231
    %1023 = vmatprep.subr.mxu0 %v238
    %1024 = vmatpush1.msra.mxu0 %v237
    %1025 = vmatprep.subr.mxu0 %v244
    %1026 = vmatpush1.msra.mxu0 %v243
    %1027 = vmatprep.subr.mxu0 %v250
    %1028 = vmatpush1.msra.mxu0 %v249
    %1029 = vmatprep.subr.mxu0 %v256
    %1030 = vmatpush1.msra.mxu0 %v255
    %1031 = vmatprep.subr.mxu0 %v262
    %1032 = vmatpush1.msra.mxu0 %v261
    %1033 = vmatprep.subr.mxu0 %v268
    %1034 = vmatpush1.msra.mxu0 %v267
    %1035 = vmatprep.subr.mxu0 %v274
    %1036 = vmatpush1.msra.mxu0 %v273
    %1037 = vmatprep.subr.mxu0 %v280
    %1038 = vmatpush1.msra.mxu0 %v279
    %1039 = vmatprep.subr.mxu0 %v286
    %1040 = vmatpush1.msra.mxu0 %v285
    %1041 = vmatprep.subr.mxu0 %v292
    %1042 = vmatpush1.msra.mxu0 %v291
    %1043 = vmatprep.subr.mxu0 %v298
    %1044 = vmatpush1.msra.mxu0 %v297
    %1045 = vmatprep.subr.mxu0 %v304
    %1046 = vmatpush1.msra.mxu0 %v303
    %1047 = vmatprep.subr.mxu0 %v310
    %1048 = vmatpush1.msra.mxu0 %v309
    %1049 = vmatprep.subr.mxu0 %v316
    %1050 = vmatpush1.msra.mxu0 %v315
    %1051 = vmatprep.subr.mxu0 %v322
    %1052 = vmatpush1.msra.mxu0 %v321
    %1053 = vmatprep.subr.mxu0 %v328
    %1054 = vmatpush1.msra.mxu0 %v327
    %1055 = vmatprep.subr.mxu0 %v334
    %1056 = vmatpush1.msra.mxu0 %v333
    %1057 = vmatprep.subr.mxu0 %v340
    %1058 = vmatpush1.msra.mxu0 %v339
    %1059 = vmatprep.subr.mxu0 %v346
    %1060 = vmatpush1.msra.mxu0 %v345
    %1061 = vmatprep.subr.mxu0 %v352
    %1062 = vmatpush1.msra.mxu0 %v351
    %1063 = vmatprep.subr.mxu0 %v358
    %1064 = vmatpush1.msra.mxu0 %v357
    %1065 = vmatprep.subr.mxu0 %v364
    %1066 = vmatpush1.msra.mxu0 %v363
    %1067 = vmatprep.subr.mxu0 %v370
    %1068 = vmatpush1.msra.mxu0 %v369
    %1069 = vmatprep.subr.mxu0 %v376
    %1070 = vmatpush1.msra.mxu0 %v375
    %1071 = vmatprep.mubr.f32.mxu0 %v779
    %1072 = vmatmul.mubr.f32.gmra.mrb[0].mxu0 %v777
    %v1073 = vpop.f32.mrb[0].mxu0
    %v1074 = vadd.f32 0.0, %v1073
    %v1075 = vpop.f32.mrb[0].mxu0
    %v1076 = vadd.f32 0.0, %v1075
    %1077 = vdwg.mxu0
    %1078 = vmatprep.subr.mxu0 %v382
    %1079 = vmatpush1.msra.mxu0 %v381
    %1080 = vmatprep.subr.mxu0 %v388
    %1081 = vmatpush1.msra.mxu0 %v387
    %1082 = vmatprep.subr.mxu0 %v394
    %1083 = vmatpush1.msra.mxu0 %v393
    %1084 = vmatprep.subr.mxu0 %v400
    %1085 = vmatpush1.msra.mxu0 %v399
    %1086 = vmatprep.subr.mxu0 %v406
    %1087 = vmatpush1.msra.mxu0 %v405
    %1088 = vmatprep.subr.mxu0 %v412
    %1089 = vmatpush1.msra.mxu0 %v411
    %1090 = vmatprep.subr.mxu0 %v418
    %1091 = vmatpush1.msra.mxu0 %v417
    %1092 = vmatprep.subr.mxu0 %v424
    %1093 = vmatpush1.msra.mxu0 %v423
    %1094 = vmatprep.subr.mxu0 %v430
    %1095 = vmatpush1.msra.mxu0 %v429
    %1096 = vmatprep.subr.mxu0 %v436
    %1097 = vmatpush1.msra.mxu0 %v435
    %1098 = vmatprep.subr.mxu0 %v442
    %1099 = vmatpush1.msra.mxu0 %v441
    %1100 = vmatprep.subr.mxu0 %v448
    %1101 = vmatpush1.msra.mxu0 %v447
    %1102 = vmatprep.subr.mxu0 %v454
    %1103 = vmatpush1.msra.mxu0 %v453
    %1104 = vmatprep.subr.mxu0 %v460
    %1105 = vmatpush1.msra.mxu0 %v459
    %1106 = vmatprep.subr.mxu0 %v466
    %1107 = vmatpush1.msra.mxu0 %v465
    %1108 = vmatprep.subr.mxu0 %v472
    %1109 = vmatpush1.msra.mxu0 %v471
    %1110 = vmatprep.subr.mxu0 %v478
    %1111 = vmatpush1.msra.mxu0 %v477
    %1112 = vmatprep.subr.mxu0 %v484
    %1113 = vmatpush1.msra.mxu0 %v483
    %1114 = vmatprep.subr.mxu0 %v490
    %1115 = vmatpush1.msra.mxu0 %v489
    %1116 = vmatprep.subr.mxu0 %v496
    %1117 = vmatpush1.msra.mxu0 %v495
    %1118 = vmatprep.subr.mxu0 %v502
    %1119 = vmatpush1.msra.mxu0 %v501
    %1120 = vmatprep.subr.mxu0 %v508
    %1121 = vmatpush1.msra.mxu0 %v507
    %1122 = vmatprep.subr.mxu0 %v514
    %1123 = vmatpush1.msra.mxu0 %v513
    %1124 = vmatprep.subr.mxu0 %v520
    %1125 = vmatpush1.msra.mxu0 %v519
    %1126 = vmatprep.subr.mxu0 %v526
    %1127 = vmatpush1.msra.mxu0 %v525
    %1128 = vmatprep.subr.mxu0 %v532
    %1129 = vmatpush1.msra.mxu0 %v531
    %1130 = vmatprep.subr.mxu0 %v538
    %1131 = vmatpush1.msra.mxu0 %v537
    %1132 = vmatprep.subr.mxu0 %v544
    %1133 = vmatpush1.msra.mxu0 %v543
    %1134 = vmatprep.subr.mxu0 %v550
    %1135 = vmatpush1.msra.mxu0 %v549
    %1136 = vmatprep.subr.mxu0 %v556
    %1137 = vmatpush1.msra.mxu0 %v555
    %1138 = vmatprep.subr.mxu0 %v562
    %1139 = vmatpush1.msra.mxu0 %v561
    %1140 = vmatprep.subr.mxu0 %v568
    %1141 = vmatpush1.msra.mxu0 %v567
    %1142 = vmatprep.mubr.f32.mxu0 %v783
    %1143 = vmatmul.mubr.f32.gmra.mrb[0].mxu0 %v781
    %v1144 = vpop.f32.mrb[0].mxu0
    %v1145 = vadd.f32 %v1074, %v1144
    %v1146 = vpop.f32.mrb[0].mxu0
    %v1147 = vadd.f32 %v1076, %v1146
    %1148 = vdwg.mxu0
    %1149 = vmatprep.subr.mxu0 %v574
    %1150 = vmatpush1.msra.mxu0 %v573
    %1151 = vmatprep.subr.mxu0 %v580
    %1152 = vmatpush1.msra.mxu0 %v579
    %1153 = vmatprep.subr.mxu0 %v586
    %1154 = vmatpush1.msra.mxu0 %v585
    %1155 = vmatprep.subr.mxu0 %v592
    %1156 = vmatpush1.msra.mxu0 %v591
    %1157 = vmatprep.subr.mxu0 %v598
    %1158 = vmatpush1.msra.mxu0 %v597
    %1159 = vmatprep.subr.mxu0 %v604
    %1160 = vmatpush1.msra.mxu0 %v603
    %1161 = vmatprep.subr.mxu0 %v610
    %1162 = vmatpush1.msra.mxu0 %v609
    %1163 = vmatprep.subr.mxu0 %v616
    %1164 = vmatpush1.msra.mxu0 %v615
    %1165 = vmatprep.subr.mxu0 %v622
    %1166 = vmatpush1.msra.mxu0 %v621
    %1167 = vmatprep.subr.mxu0 %v628
    %1168 = vmatpush1.msra.mxu0 %v627
    %1169 = vmatprep.subr.mxu0 %v634
    %1170 = vmatpush1.msra.mxu0 %v633
    %1171 = vmatprep.subr.mxu0 %v640
    %1172 = vmatpush1.msra.mxu0 %v639
    %1173 = vmatprep.subr.mxu0 %v646
    %1174 = vmatpush1.msra.mxu0 %v645
    %1175 = vmatprep.subr.mxu0 %v652
    %1176 = vmatpush1.msra.mxu0 %v651
    %1177 = vmatprep.subr.mxu0 %v658
    %1178 = vmatpush1.msra.mxu0 %v657
    %1179 = vmatprep.subr.mxu0 %v664
    %1180 = vmatpush1.msra.mxu0 %v663
    %1181 = vmatprep.subr.mxu0 %v670
    %1182 = vmatpush1.msra.mxu0 %v669
    %1183 = vmatprep.subr.mxu0 %v676
    %1184 = vmatpush1.msra.mxu0 %v675
    %1185 = vmatprep.subr.mxu0 %v682
    %1186 = vmatpush1.msra.mxu0 %v681
    %1187 = vmatprep.subr.mxu0 %v688
    %1188 = vmatpush1.msra.mxu0 %v687
    %1189 = vmatprep.subr.mxu0 %v694
    %1190 = vmatpush1.msra.mxu0 %v693
    %1191 = vmatprep.subr.mxu0 %v700
    %1192 = vmatpush1.msra.mxu0 %v699
    %1193 = vmatprep.subr.mxu0 %v706
    %1194 = vmatpush1.msra.mxu0 %v705
    %1195 = vmatprep.subr.mxu0 %v712
    %1196 = vmatpush1.msra.mxu0 %v711
    %1197 = vmatprep.subr.mxu0 %v718
    %1198 = vmatpush1.msra.mxu0 %v717
    %1199 = vmatprep.subr.mxu0 %v724
    %1200 = vmatpush1.msra.mxu0 %v723
    %1201 = vmatprep.subr.mxu0 %v730
    %1202 = vmatpush1.msra.mxu0 %v729
    %1203 = vmatprep.subr.mxu0 %v736
    %1204 = vmatpush1.msra.mxu0 %v735
    %1205 = vmatprep.subr.mxu0 %v742
    %1206 = vmatpush1.msra.mxu0 %v741
    %1207 = vmatprep.subr.mxu0 %v748
    %1208 = vmatpush1.msra.mxu0 %v747
    %1209 = vmatprep.subr.mxu0 %v754
    %1210 = vmatpush1.msra.mxu0 %v753
    %1211 = vmatprep.subr.mxu0 %v760
    %1212 = vmatpush1.msra.mxu0 %v759
    %1213 = vmatprep.mubr.f32.mxu0 %v787
    %1214 = vmatmul.mubr.f32.gmra.mrb[0].mxu0 %v785
    %v1215 = vpop.f32.mrb[0].mxu0
    %v1216 = vadd.f32 %v1145, %v1215
    %v1217 = vpop.f32.mrb[0].mxu0
    %v1218 = vadd.f32 %v1147, %v1217
    %1219 = vdwg.mxu0
    %1220 = vmatprep.subr.mxu0 %v192
    %1221 = vmatpush1.msra.mxu0 %v191
    %1222 = vmatprep.subr.mxu0 %v198
    %1223 = vmatpush1.msra.mxu0 %v197
    %1224 = vmatprep.subr.mxu0 %v204
    %1225 = vmatpush1.msra.mxu0 %v203
    %1226 = vmatprep.subr.mxu0 %v210
    %1227 = vmatpush1.msra.mxu0 %v209
    %1228 = vmatprep.subr.mxu0 %v216
    %1229 = vmatpush1.msra.mxu0 %v215
    %1230 = vmatprep.subr.mxu0 %v222
    %1231 = vmatpush1.msra.mxu0 %v221
    %1232 = vmatprep.subr.mxu0 %v228
    %1233 = vmatpush1.msra.mxu0 %v227
    %1234 = vmatprep.subr.mxu0 %v234
    %1235 = vmatpush1.msra.mxu0 %v233
    %1236 = vmatprep.subr.mxu0 %v240
    %1237 = vmatpush1.msra.mxu0 %v239
    %1238 = vmatprep.subr.mxu0 %v246
    %1239 = vmatpush1.msra.mxu0 %v245
    %1240 = vmatprep.subr.mxu0 %v252
    %1241 = vmatpush1.msra.mxu0 %v251
    %1242 = vmatprep.subr.mxu0 %v258
    %1243 = vmatpush1.msra.mxu0 %v257
    %1244 = vmatprep.subr.mxu0 %v264
    %1245 = vmatpush1.msra.mxu0 %v263
    %1246 = vmatprep.subr.mxu0 %v270
    %1247 = vmatpush1.msra.mxu0 %v269
    %1248 = vmatprep.subr.mxu0 %v276
    %1249 = vmatpush1.msra.mxu0 %v275
    %1250 = vmatprep.subr.mxu0 %v282
    %1251 = vmatpush1.msra.mxu0 %v281
    %1252 = vmatprep.subr.mxu0 %v288
    %1253 = vmatpush1.msra.mxu0 %v287
    %1254 = vmatprep.subr.mxu0 %v294
    %1255 = vmatpush1.msra.mxu0 %v293
    %1256 = vmatprep.subr.mxu0 %v300
    %1257 = vmatpush1.msra.mxu0 %v299
    %1258 = vmatprep.subr.mxu0 %v306
    %1259 = vmatpush1.msra.mxu0 %v305
    %1260 = vmatprep.subr.mxu0 %v312
    %1261 = vmatpush1.msra.mxu0 %v311
    %1262 = vmatprep.subr.mxu0 %v318
    %1263 = vmatpush1.msra.mxu0 %v317
    %1264 = vmatprep.subr.mxu0 %v324
    %1265 = vmatpush1.msra.mxu0 %v323
    %1266 = vmatprep.subr.mxu0 %v330
    %1267 = vmatpush1.msra.mxu0 %v329
    %1268 = vmatprep.subr.mxu0 %v336
    %1269 = vmatpush1.msra.mxu0 %v335
    %1270 = vmatprep.subr.mxu0 %v342
    %1271 = vmatpush1.msra.mxu0 %v341
    %1272 = vmatprep.subr.mxu0 %v348
    %1273 = vmatpush1.msra.mxu0 %v347
    %1274 = vmatprep.subr.mxu0 %v354
    %1275 = vmatpush1.msra.mxu0 %v353
    %1276 = vmatprep.subr.mxu0 %v360
    %1277 = vmatpush1.msra.mxu0 %v359
    %1278 = vmatprep.subr.mxu0 %v366
    %1279 = vmatpush1.msra.mxu0 %v365
    %1280 = vmatprep.subr.mxu0 %v372
    %1281 = vmatpush1.msra.mxu0 %v371
    %1282 = vmatprep.subr.mxu0 %v378
    %1283 = vmatpush1.msra.mxu0 %v377
    %1284 = vmatprep.mubr.f32.mxu0 %v779
    %1285 = vmatmul.mubr.f32.gmra.mrb[0].mxu0 %v777
    %v1286 = vpop.f32.mrb[0].mxu0
    %v1287 = vadd.f32 0.0, %v1286
    %v1288 = vpop.f32.mrb[0].mxu0
    %v1289 = vadd.f32 0.0, %v1288
    %1290 = vdwg.mxu0
    %1291 = vmatprep.subr.mxu0 %v384
    %1292 = vmatpush1.msra.mxu0 %v383
    %1293 = vmatprep.subr.mxu0 %v390
    %1294 = vmatpush1.msra.mxu0 %v389
    %1295 = vmatprep.subr.mxu0 %v396
    %1296 = vmatpush1.msra.mxu0 %v395
    %1297 = vmatprep.subr.mxu0 %v402
    %1298 = vmatpush1.msra.mxu0 %v401
    %1299 = vmatprep.subr.mxu0 %v408
    %1300 = vmatpush1.msra.mxu0 %v407
    %1301 = vmatprep.subr.mxu0 %v414
    %1302 = vmatpush1.msra.mxu0 %v413
    %1303 = vmatprep.subr.mxu0 %v420
    %1304 = vmatpush1.msra.mxu0 %v419
    %1305 = vmatprep.subr.mxu0 %v426
    %1306 = vmatpush1.msra.mxu0 %v425
    %1307 = vmatprep.subr.mxu0 %v432
    %1308 = vmatpush1.msra.mxu0 %v431
    %1309 = vmatprep.subr.mxu0 %v438
    %1310 = vmatpush1.msra.mxu0 %v437
    %1311 = vmatprep.subr.mxu0 %v444
    %1312 = vmatpush1.msra.mxu0 %v443
    %1313 = vmatprep.subr.mxu0 %v450
    %1314 = vmatpush1.msra.mxu0 %v449
    %1315 = vmatprep.subr.mxu0 %v456
    %1316 = vmatpush1.msra.mxu0 %v455
    %1317 = vmatprep.subr.mxu0 %v462
    %1318 = vmatpush1.msra.mxu0 %v461
    %1319 = vmatprep.subr.mxu0 %v468
    %1320 = vmatpush1.msra.mxu0 %v467
    %1321 = vmatprep.subr.mxu0 %v474
    %1322 = vmatpush1.msra.mxu0 %v473
    %1323 = vmatprep.subr.mxu0 %v480
    %1324 = vmatpush1.msra.mxu0 %v479
    %1325 = vmatprep.subr.mxu0 %v486
    %1326 = vmatpush1.msra.mxu0 %v485
    %1327 = vmatprep.subr.mxu0 %v492
    %1328 = vmatpush1.msra.mxu0 %v491
    %1329 = vmatprep.subr.mxu0 %v498
    %1330 = vmatpush1.msra.mxu0 %v497
    %1331 = vmatprep.subr.mxu0 %v504
    %1332 = vmatpush1.msra.mxu0 %v503
    %1333 = vmatprep.subr.mxu0 %v510
    %1334 = vmatpush1.msra.mxu0 %v509
    %1335 = vmatprep.subr.mxu0 %v516
    %1336 = vmatpush1.msra.mxu0 %v515
    %1337 = vmatprep.subr.mxu0 %v522
    %1338 = vmatpush1.msra.mxu0 %v521
    %1339 = vmatprep.subr.mxu0 %v528
    %1340 = vmatpush1.msra.mxu0 %v527
    %1341 = vmatprep.subr.mxu0 %v534
    %1342 = vmatpush1.msra.mxu0 %v533
    %1343 = vmatprep.subr.mxu0 %v540
    %1344 = vmatpush1.msra.mxu0 %v539
    %1345 = vmatprep.subr.mxu0 %v546
    %1346 = vmatpush1.msra.mxu0 %v545
    %1347 = vmatprep.subr.mxu0 %v552
    %1348 = vmatpush1.msra.mxu0 %v551
    %1349 = vmatprep.subr.mxu0 %v558
    %1350 = vmatpush1.msra.mxu0 %v557
    %1351 = vmatprep.subr.mxu0 %v564
    %1352 = vmatpush1.msra.mxu0 %v563
    %1353 = vmatprep.subr.mxu0 %v570
    %1354 = vmatpush1.msra.mxu0 %v569
    %1355 = vmatprep.mubr.f32.mxu0 %v783
    %1356 = vmatmul.mubr.f32.gmra.mrb[0].mxu0 %v781
    %v1357 = vpop.f32.mrb[0].mxu0
    %v1358 = vadd.f32 %v1287, %v1357
    %v1359 = vpop.f32.mrb[0].mxu0
    %v1360 = vadd.f32 %v1289, %v1359
    %1361 = vdwg.mxu0
    %1362 = vmatprep.subr.mxu0 %v576
    %1363 = vmatpush1.msra.mxu0 %v575
    %1364 = vmatprep.subr.mxu0 %v582
    %1365 = vmatpush1.msra.mxu0 %v581
    %1366 = vmatprep.subr.mxu0 %v588
    %1367 = vmatpush1.msra.mxu0 %v587
    %1368 = vmatprep.subr.mxu0 %v594
    %1369 = vmatpush1.msra.mxu0 %v593
    %1370 = vmatprep.subr.mxu0 %v600
    %1371 = vmatpush1.msra.mxu0 %v599
    %1372 = vmatprep.subr.mxu0 %v606
    %1373 = vmatpush1.msra.mxu0 %v605
    %1374 = vmatprep.subr.mxu0 %v612
    %1375 = vmatpush1.msra.mxu0 %v611
    %1376 = vmatprep.subr.mxu0 %v618
    %1377 = vmatpush1.msra.mxu0 %v617
    %1378 = vmatprep.subr.mxu0 %v624
    %1379 = vmatpush1.msra.mxu0 %v623
    %1380 = vmatprep.subr.mxu0 %v630
    %1381 = vmatpush1.msra.mxu0 %v629
    %1382 = vmatprep.subr.mxu0 %v636
    %1383 = vmatpush1.msra.mxu0 %v635
    %1384 = vmatprep.subr.mxu0 %v642
    %1385 = vmatpush1.msra.mxu0 %v641
    %1386 = vmatprep.subr.mxu0 %v648
    %1387 = vmatpush1.msra.mxu0 %v647
    %1388 = vmatprep.subr.mxu0 %v654
    %1389 = vmatpush1.msra.mxu0 %v653
    %1390 = vmatprep.subr.mxu0 %v660
    %1391 = vmatpush1.msra.mxu0 %v659
    %1392 = vmatprep.subr.mxu0 %v666
    %1393 = vmatpush1.msra.mxu0 %v665
    %1394 = vmatprep.subr.mxu0 %v672
    %1395 = vmatpush1.msra.mxu0 %v671
    %1396 = vmatprep.subr.mxu0 %v678
    %1397 = vmatpush1.msra.mxu0 %v677
    %1398 = vmatprep.subr.mxu0 %v684
    %1399 = vmatpush1.msra.mxu0 %v683
    %1400 = vmatprep.subr.mxu0 %v690
    %1401 = vmatpush1.msra.mxu0 %v689
    %1402 = vmatprep.subr.mxu0 %v696
    %1403 = vmatpush1.msra.mxu0 %v695
    %1404 = vmatprep.subr.mxu0 %v702
    %1405 = vmatpush1.msra.mxu0 %v701
    %1406 = vmatprep.subr.mxu0 %v708
    %1407 = vmatpush1.msra.mxu0 %v707
    %1408 = vmatprep.subr.mxu0 %v714
    %1409 = vmatpush1.msra.mxu0 %v713
    %1410 = vmatprep.subr.mxu0 %v720
    %1411 = vmatpush1.msra.mxu0 %v719
    %1412 = vmatprep.subr.mxu0 %v726
    %1413 = vmatpush1.msra.mxu0 %v725
    %1414 = vmatprep.subr.mxu0 %v732
    %1415 = vmatpush1.msra.mxu0 %v731
    %1416 = vmatprep.subr.mxu0 %v738
    %1417 = vmatpush1.msra.mxu0 %v737
    %1418 = vmatprep.subr.mxu0 %v744
    %1419 = vmatpush1.msra.mxu0 %v743
    %1420 = vmatprep.subr.mxu0 %v750
    %1421 = vmatpush1.msra.mxu0 %v749
    %1422 = vmatprep.subr.mxu0 %v756
    %1423 = vmatpush1.msra.mxu0 %v755
    %1424 = vmatprep.subr.mxu0 %v762
    %1425 = vmatpush1.msra.mxu0 %v761
    %1426 = vmatprep.mubr.f32.mxu0 %v787
    %1427 = vmatmul.mubr.f32.gmra.mrb[0].mxu0 %v785
    %v1428 = vpop.f32.mrb[0].mxu0
    %v1429 = vadd.f32 %v1358, %v1428
    %v1430 = vpop.f32.mrb[0].mxu0
    %v1431 = vadd.f32 %v1360, %v1430
    %1432 = vdwg.mxu0
    %v1433 = vmul.f32 %v1003, %v1003
    %v1434 = vmul.f32 %v1005, %v1005
    %v1435 = vmul.f32 %v1216, %v1216
    %v1436 = vmul.f32 %v1218, %v1218
    %v1437 = vmul.f32 %v1429, %v1429
    %v1438 = vmul.f32 %v1431, %v1431
    %vm1439 = vcmask 1041408
    %v1440 = vsel %vm1439, %v1433, 0.0
    %v1441 = vsel %vm1439, %v1434, 0.0
    %v1442 = vadd.f32 %v1440, %v1441
    %v1443 = vsel %vm1439, %v1435, 0.0
    %v1444 = vadd.f32 %v1442, %v1443
    %v1445 = vsel %vm1439, %v1436, 0.0
    %v1446 = vadd.f32 %v1444, %v1445
    %v1447 = vsel %vm1439, %v1437, 0.0
    %v1448 = vadd.f32 %v1446, %v1447
    %v1449 = vsel %vm1439, %v1438, 0.0
    %v1450 = vadd.f32 %v1448, %v1449
    %1451 = vadd.xlane.f32.xlu0 %v1450
    %v1452 = vpop.xlane.xlu0 %1451
    %v1453 = vmax.f32 %v1452, 1e-24
    %v1454 = vrsqrt.pop %v1453
    %v1455 = vmul.f32 %v1003, %v1454
    %v1456 = vmul.f32 %v1005, %v1454
    %v1457 = vmul.f32 %v1216, %v1454
    %v1458 = vmul.f32 %v1218, %v1454
    %v1459 = vmul.f32 %v1429, %v1454
    %v1460 = vmul.f32 %v1431, %v1454
    %v1467 = vcombine.low %v1455, %v1456
    %v1468 = vcombine.low %v1457, %v1458
    %v1470 = vunpack.c.l.s4 1983009808
    %v1471 = vunpack.c.0.s8 %v1470
    %v1472 = vlaneseq
    %v1473 = vshrl.u32 %v1472, 7
    %v1474 = vsub.s32 %v1471, %v1473
    %v1475 = vrot.slane %v1467, %v1474
    %v1477 = vunpack.c.l.s4 1983009808
    %v1478 = vunpack.c.0.s8 %v1477
    %v1479 = vlaneseq
    %v1480 = vshrl.u32 %v1479, 7
    %v1481 = vsub.s32 %v1478, %v1480
    %v1482 = vrot.slane %v1468, %v1481
    %v1483 = vcombine.low %v1475, %v1482
    %v1484 = vcombine.low %v1459, %v1460
    %v1486 = vunpack.c.l.s4 1983009808
    %v1487 = vunpack.c.0.s8 %v1486
    %v1488 = vlaneseq
    %v1489 = vshrl.u32 %v1488, 7
    %v1490 = vsub.s32 %v1487, %v1489
    %v1491 = vrot.slane %v1484, %v1490
    %1494 = vst [vmem:[#allocation8] sm:$0xff] %v1483
    %1495 = vst [vmem:[#allocation8 + $0x8] sm:$0xf] %v1491
    // Predicated region
    $region26: #{tpu_custom_call.1} parent=1 // pred_check
      _
    $region27: #{tpu_custom_call.1} parent=1 // pred_check_branch
      %1497 = sbr.rel (0) target = $region29
    $region28: #{tpu_custom_call.1} parent=1 // pred_region
      %s1499 = ssub.s32 192, 192
      %1500 = vsyncadd [#allocation4], %s1499
      %s1502 = sshll.u32 [#allocation8], 4
      %s1503 = int_to_ptr.vmem [resolvable:$true] %s1502
      %1505 = dma.vmem_to_hbm [thread:$0]  %s1503, 192, %s3, [#allocation4]
    $region29: #{tpu_custom_call.1} parent=1 // pred_fallthru
      _
    // Predicated region
    $region30: #{tpu_custom_call.1} parent=1 // pred_check
      _
    $region31: #{tpu_custom_call.1} parent=1 // pred_check_branch
      %1507 = sbr.rel (0) target = $region33
    $region32: #{tpu_custom_call.1} parent=1 // pred_region
      %1508 = dma.done [#allocation4], 192
    $region33: #{tpu_custom_call.1} parent=1 // pred_fallthru
      _
    %1509 = vsyncpa [#allocation3], 1
    %1510 = vsyncpa [#allocation6], 1
    %1511 = vsyncpa [#allocation4], 1

</llo_original>
